<compile_context>
chip_gen: v7x
topology: tpu7x:2x2x1
jax: 0.10.0
libtpu: 0.0.40
codegen_flags: <defaults>
</compile_context>

<pallas_src>
import jax
import jax.numpy as jnp
from jax.experimental import pallas as pl
from jax.experimental.pallas import tpu as pltpu


def _round_up(x, m):
    return ((x + m - 1) // m) * m


def _output_head_kernel(x_ref, w1_ref, b1_ref, w2_ref, b2_ref, o_ref, xp_ref):
    """Fused ConvBNReLU(3x3, s1, p1) + Conv1x1(+bias) over the whole batch.

    x_ref : (N, H, W, Cin)      bf16 NHWC input (whole batch)
    w1_ref: (9*Cin, mid)        bf16 3x3 weights, BN scale folded, im2col layout
    b1_ref: (1, mid)            f32 folded BN bias
    w2_ref: (mid, out_c_pad)    bf16 1x1 weights, zero-padded to 128-lane width
    b2_ref: (1, out_c_pad)      f32 1x1 bias (zero-padded)
    o_ref : (N*H*W, out_c_pad)  f32 lane-dense output slab
    xp_ref: (N, H+2, W+2, Cin)  bf16 VMEM scratch holding the zero-padded images
    """
    N, H, W, Cin = x_ref.shape

    # pad=1 built inside VMEM. Single grid step => this zero fill happens once
    # per call (not per image); the interior is fully overwritten below.
    xp_ref[...] = jnp.zeros(xp_ref.shape, xp_ref.dtype)
    xp_ref[:, 1:H + 1, 1:W + 1, :] = x_ref[...]

    # im2col in bf16: nine unit-stride shifted views concatenated on the
    # channel (lane) axis, flattened to (M, 9*Cin) with M = N*H*W.
    # Column order (kh, kw, c) matches the wrapper's w1.reshape(9*Cin, mid).
    cols = []
    for kh in range(3):
        for kw in range(3):
            cols.append(xp_ref[:, kh:kh + H, kw:kw + W, :])     # (N, H, W, Cin)
    patch = jnp.concatenate(cols, axis=-1)                      # (N, H, W, 9*Cin)
    patch = patch.reshape(N * H * W, 9 * Cin)                   # bf16 (M, 288)

    # Stage 1: conv3x3 as ONE deep K=9*Cin contraction (BN scale pre-folded),
    # f32 accumulation, f32 epilogue (+bias, ReLU).
    y1 = jnp.dot(patch, w1_ref[...], preferred_element_type=jnp.float32)
    y1 = jnp.maximum(y1 + b1_ref[...], 0.0)                     # (M, mid) f32

    # Stage 2: conv1x1 + bias; out_c is padded to a multiple of 128 lanes in
    # the wrapper so this store is a full, unmasked lane-dense write.
    y2 = jnp.dot(y1.astype(jnp.bfloat16), w2_ref[...],
                 preferred_element_type=jnp.float32)            # (M, out_c_pad)
    o_ref[...] = (y2 + b2_ref[...]).astype(o_ref.dtype)


def output_head_forward(x_nchw, params, up_factor):
    """x_nchw: (N, Cin, H, W) f32 (PyTorch layout). Returns (N, n_classes, H*r, W*r)."""
    N, Cin, H, W = x_nchw.shape
    mid = params["w1"].shape[-1]
    out_c = params["w2"].shape[-1]
    r = up_factor
    n_classes = out_c // (r * r)
    out_c_pad = max(128, _round_up(out_c, 128))      # lane-dense output width

    # NCHW -> NHWC with the bf16 cast fused into the same transpose (halves
    # the HBM->VMEM DMA bytes of the only large input).
    x = jnp.transpose(x_nchw, (0, 2, 3, 1)).astype(jnp.bfloat16)

    # One-time weight prep: fold BN scale into the 3x3 weights, flatten to the
    # im2col (9*Cin, mid) slab; zero-pad the 1x1 weights/bias to out_c_pad.
    w1 = params["w1"] * params["bn_scale"][None, None, None, :]
    w1 = w1.reshape(9 * Cin, mid).astype(jnp.bfloat16)
    b1 = params["bn_bias"].reshape(1, mid).astype(jnp.float32)
    w2 = jnp.zeros((mid, out_c_pad), jnp.bfloat16).at[:, :out_c].set(
        params["w2"].astype(jnp.bfloat16))
    b2 = jnp.zeros((1, out_c_pad), jnp.float32).at[:, :out_c].set(
        params["b2"].reshape(1, out_c).astype(jnp.float32))

    # Single pallas_call, single invocation (no grid): all of N*H*W is one
    # matmul M dimension, everything stays VMEM resident, one prologue, and
    # the constant weights are not multi-buffered or re-fetched.
    y_flat = pl.pallas_call(
        _output_head_kernel,
        out_shape=jax.ShapeDtypeStruct((N * H * W, out_c_pad), jnp.float32),
        in_specs=[pl.BlockSpec(memory_space=pltpu.MemorySpace.VMEM)] * 5,
        out_specs=pl.BlockSpec(memory_space=pltpu.MemorySpace.VMEM),
        scratch_shapes=[pltpu.VMEM((N, H + 2, W + 2, Cin), jnp.bfloat16)],
    )(x, w1, b1, w2, b2)

    # Drop the lane padding, then PixelShuffle(up_factor): pure permutation ->
    # reshape/transpose glue on the flat (N*H*W, out_c) slab.
    y = y_flat[:, :out_c].reshape(N, H, W, n_classes, r, r)
    y = jnp.transpose(y, (0, 3, 1, 4, 2, 5))                   # N, C, H, r, W, r
    return y.reshape(N, n_classes, H * r, W * r)


def _reference_forward(x_nchw, params, up_factor):
    """Pure-JAX f32 reference of Output.forward (eval-mode BN)."""
    x = jnp.transpose(x_nchw, (0, 2, 3, 1)).astype(jnp.float32)
    y = jax.lax.conv_general_dilated(
        x, params["w1"], window_strides=(1, 1), padding="SAME",
        dimension_numbers=("NHWC", "HWIO", "NHWC"))
    y = y * params["bn_scale"] + params["bn_bias"]
    y = jnp.maximum(y, 0.0)
    y = jnp.einsum("nhwc,cd->nhwd", y, params["w2"]) + params["b2"]
    N, H, W, C = y.shape
    r = up_factor
    nc = C // (r * r)
    y = y.reshape(N, H, W, nc, r, r)
    y = jnp.transpose(y, (0, 3, 1, 4, 2, 5))
    return y.reshape(N, nc, H * r, W * r)


def init_output_params(key, in_chan, mid_chan, n_classes, up_factor):
    """Synthetic Output params. Conv weights HWIO; BN in eval-mode (folded later)."""
    out_chan = n_classes * up_factor * up_factor
    ks = jax.random.split(key, 7)

    w1 = jax.random.normal(ks[0], (3, 3, in_chan, mid_chan), jnp.float32)
    w1 = w1 * (2.0 / (9 * in_chan)) ** 0.5                    # ~kaiming scale

    gamma = 1.0 + 0.1 * jax.random.normal(ks[1], (mid_chan,), jnp.float32)
    beta = 0.1 * jax.random.normal(ks[2], (mid_chan,), jnp.float32)
    mean = 0.05 * jax.random.normal(ks[3], (mid_chan,), jnp.float32)
    var = jnp.abs(jax.random.normal(ks[4], (mid_chan,), jnp.float32)) + 1.0
    eps = 1e-5
    bn_scale = gamma / jnp.sqrt(var + eps)
    bn_bias = beta - mean * bn_scale

    w2 = jax.random.normal(ks[5], (mid_chan, out_chan), jnp.float32)
    w2 = w2 * (2.0 / mid_chan) ** 0.5
    b2 = 0.05 * jax.random.normal(ks[6], (out_chan,), jnp.float32)

    return {"w1": w1, "bn_scale": bn_scale, "bn_bias": bn_bias,
            "w2": w2, "b2": b2}


if __name__ == "__main__":
    key = jax.random.PRNGKey(0)
    k_x, k_p = jax.random.split(key)

    # Small shapes consistent with the module: Output(in_chan=32, mid_chan=64,
    # n_classes=4, up_factor=4) on an 8x8 feature map.
    N, in_chan, H, W = 2, 32, 8, 8
    mid_chan, n_classes, up_factor = 64, 4, 4

    x = jax.random.normal(k_x, (N, in_chan, H, W), jnp.float32)   # NCHW like torch
    params = init_output_params(k_p, in_chan, mid_chan, n_classes, up_factor)

    y = output_head_forward(x, params, up_factor)
    y = jax.block_until_ready(y)

    assert y.shape == (N, n_classes, H * up_factor, W * up_factor), y.shape
    assert bool(jnp.all(jnp.isfinite(y)))

    # Numerical check vs pure-JAX f32 reference (bf16 MXU operands, f32 acc).
    y_ref = _reference_forward(x, params, up_factor)
    assert bool(jnp.allclose(y, y_ref, rtol=5e-2, atol=5e-2)), float(
        jnp.max(jnp.abs(y - y_ref)))

    print("KERNEL_OK")
</pallas_src>

<mosaic_0001>
module attributes {stable_mosaic.version = 11 : i64} {
  func.func @_output_head_kernel(%arg0: memref<2x8x8x32xbf16, #tpu.memory_space<vmem>>, %arg1: memref<288x64xbf16, #tpu.memory_space<vmem>>, %arg2: memref<1x64xf32, #tpu.memory_space<vmem>>, %arg3: memref<64x128xbf16, #tpu.memory_space<vmem>>, %arg4: memref<1x128xf32, #tpu.memory_space<vmem>>, %arg5: memref<128x128xf32, #tpu.memory_space<vmem>>, %arg6: memref<2x10x10x32xbf16, #tpu.memory_space<vmem>>) attributes {dimension_semantics = [], scalar_prefetch = 0 : i64, scratch_operands = 1 : i64, tpu.core_type = #tpu.core_type<tc>} {
    %cst = arith.constant 0.000000e+00 : bf16
    %0 = vector.broadcast %cst : bf16 to vector<2x10x10x32xbf16>
    %c0 = arith.constant 0 : index
    %c0_0 = arith.constant 0 : index
    %c0_1 = arith.constant 0 : index
    %c0_2 = arith.constant 0 : index
    %1 = vector.load %arg6[%c0, %c0_0, %c0_1, %c0_2] : memref<2x10x10x32xbf16, #tpu.memory_space<vmem>>, vector<2x10x10x32xbf16>
    tpu.vector_store %arg6[%c0, %c0_0, %c0_1, %c0_2], %0 {strides = array<i32>} : memref<2x10x10x32xbf16, #tpu.memory_space<vmem>>, vector<2x10x10x32xbf16>,
    %c0_3 = arith.constant 0 : index
    %c0_4 = arith.constant 0 : index
    %c0_5 = arith.constant 0 : index
    %c0_6 = arith.constant 0 : index
    %2 = vector.load %arg0[%c0_3, %c0_4, %c0_5, %c0_6] : memref<2x8x8x32xbf16, #tpu.memory_space<vmem>>, vector<2x8x8x32xbf16>
    %c0_7 = arith.constant 0 : index
    %c1 = arith.constant 1 : index
    %c1_8 = arith.constant 1 : index
    %c0_9 = arith.constant 0 : index
    %3 = vector.load %arg6[%c0_7, %c1, %c1_8, %c0_9] : memref<2x10x10x32xbf16, #tpu.memory_space<vmem>>, vector<2x8x8x32xbf16>
    tpu.vector_store %arg6[%c0_7, %c1, %c1_8, %c0_9], %2 {strides = array<i32>} : memref<2x10x10x32xbf16, #tpu.memory_space<vmem>>, vector<2x8x8x32xbf16>,
    %c0_10 = arith.constant 0 : index
    %c0_11 = arith.constant 0 : index
    %c0_12 = arith.constant 0 : index
    %c0_13 = arith.constant 0 : index
    %4 = vector.load %arg6[%c0_10, %c0_11, %c0_12, %c0_13] : memref<2x10x10x32xbf16, #tpu.memory_space<vmem>>, vector<2x8x8x32xbf16>
    %c0_14 = arith.constant 0 : index
    %c0_15 = arith.constant 0 : index
    %c1_16 = arith.constant 1 : index
    %c0_17 = arith.constant 0 : index
    %5 = vector.load %arg6[%c0_14, %c0_15, %c1_16, %c0_17] : memref<2x10x10x32xbf16, #tpu.memory_space<vmem>>, vector<2x8x8x32xbf16>
    %c0_18 = arith.constant 0 : index
    %c0_19 = arith.constant 0 : index
    %c2 = arith.constant 2 : index
    %c0_20 = arith.constant 0 : index
    %6 = vector.load %arg6[%c0_18, %c0_19, %c2, %c0_20] : memref<2x10x10x32xbf16, #tpu.memory_space<vmem>>, vector<2x8x8x32xbf16>
    %c0_21 = arith.constant 0 : index
    %c1_22 = arith.constant 1 : index
    %c0_23 = arith.constant 0 : index
    %c0_24 = arith.constant 0 : index
    %7 = vector.load %arg6[%c0_21, %c1_22, %c0_23, %c0_24] : memref<2x10x10x32xbf16, #tpu.memory_space<vmem>>, vector<2x8x8x32xbf16>
    %c0_25 = arith.constant 0 : index
    %c1_26 = arith.constant 1 : index
    %c1_27 = arith.constant 1 : index
    %c0_28 = arith.constant 0 : index
    %8 = vector.load %arg6[%c0_25, %c1_26, %c1_27, %c0_28] : memref<2x10x10x32xbf16, #tpu.memory_space<vmem>>, vector<2x8x8x32xbf16>
    %c0_29 = arith.constant 0 : index
    %c1_30 = arith.constant 1 : index
    %c2_31 = arith.constant 2 : index
    %c0_32 = arith.constant 0 : index
    %9 = vector.load %arg6[%c0_29, %c1_30, %c2_31, %c0_32] : memref<2x10x10x32xbf16, #tpu.memory_space<vmem>>, vector<2x8x8x32xbf16>
    %c0_33 = arith.constant 0 : index
    %c2_34 = arith.constant 2 : index
    %c0_35 = arith.constant 0 : index
    %c0_36 = arith.constant 0 : index
    %10 = vector.load %arg6[%c0_33, %c2_34, %c0_35, %c0_36] : memref<2x10x10x32xbf16, #tpu.memory_space<vmem>>, vector<2x8x8x32xbf16>
    %c0_37 = arith.constant 0 : index
    %c2_38 = arith.constant 2 : index
    %c1_39 = arith.constant 1 : index
    %c0_40 = arith.constant 0 : index
    %11 = vector.load %arg6[%c0_37, %c2_38, %c1_39, %c0_40] : memref<2x10x10x32xbf16, #tpu.memory_space<vmem>>, vector<2x8x8x32xbf16>
    %c0_41 = arith.constant 0 : index
    %c2_42 = arith.constant 2 : index
    %c2_43 = arith.constant 2 : index
    %c0_44 = arith.constant 0 : index
    %12 = vector.load %arg6[%c0_41, %c2_42, %c2_43, %c0_44] : memref<2x10x10x32xbf16, #tpu.memory_space<vmem>>, vector<2x8x8x32xbf16>
    %13 = tpu.concatenate %4, %5, %6, %7, %8, %9, %10, %11, %12 in 3 : vector<2x8x8x32xbf16>, vector<2x8x8x32xbf16>, vector<2x8x8x32xbf16>, vector<2x8x8x32xbf16>, vector<2x8x8x32xbf16>, vector<2x8x8x32xbf16>, vector<2x8x8x32xbf16>, vector<2x8x8x32xbf16>, vector<2x8x8x32xbf16> -> vector<2x8x8x288xbf16>
    %14 = vector.shape_cast %13 : vector<2x8x8x288xbf16> to vector<128x288xbf16>
    %c0_45 = arith.constant 0 : index
    %c0_46 = arith.constant 0 : index
    %15 = vector.load %arg1[%c0_45, %c0_46] : memref<288x64xbf16, #tpu.memory_space<vmem>>, vector<288x64xbf16>
    %cst_47 = arith.constant dense<0.000000e+00> : vector<128x64xf32>
    %16 = tpu.matmul %14, %15, %cst_47 {dimension_numbers = #tpu.dot_dimension_numbers<[1], [0], [0], [1], [0, 0, 1, 1], [], []>} : vector<128x288xbf16>, vector<288x64xbf16>, vector<128x64xf32> -> vector<128x64xf32>
    %c0_48 = arith.constant 0 : index
    %c0_49 = arith.constant 0 : index
    %17 = vector.load %arg2[%c0_48, %c0_49] : memref<1x64xf32, #tpu.memory_space<vmem>>, vector<1x64xf32>
    %18 = vector.broadcast %17 : vector<1x64xf32> to vector<128x64xf32>
    %19 = arith.addf %16, %18 : vector<128x64xf32>
    %cst_50 = arith.constant 0.000000e+00 : f32
    %20 = vector.broadcast %cst_50 : f32 to vector<128x64xf32>
    %21 = arith.maximumf %19, %20 : vector<128x64xf32>
    %22 = arith.truncf %21 : vector<128x64xf32> to vector<128x64xbf16>
    %c0_51 = arith.constant 0 : index
    %c0_52 = arith.constant 0 : index
    %23 = vector.load %arg3[%c0_51, %c0_52] : memref<64x128xbf16, #tpu.memory_space<vmem>>, vector<64x128xbf16>
    %cst_53 = arith.constant dense<0.000000e+00> : vector<128x128xf32>
    %24 = tpu.matmul %22, %23, %cst_53 {dimension_numbers = #tpu.dot_dimension_numbers<[1], [0], [0], [1], [0, 0, 1, 1], [], []>} : vector<128x64xbf16>, vector<64x128xbf16>, vector<128x128xf32> -> vector<128x128xf32>
    %c0_54 = arith.constant 0 : index
    %c0_55 = arith.constant 0 : index
    %25 = vector.load %arg4[%c0_54, %c0_55] : memref<1x128xf32, #tpu.memory_space<vmem>>, vector<1x128xf32>
    %26 = vector.broadcast %25 : vector<1x128xf32> to vector<128x128xf32>
    %27 = arith.addf %24, %26 : vector<128x128xf32>
    %c0_56 = arith.constant 0 : index
    %c0_57 = arith.constant 0 : index
    %28 = vector.load %arg5[%c0_56, %c0_57] : memref<128x128xf32, #tpu.memory_space<vmem>>, vector<128x128xf32>
    tpu.vector_store %arg5[%c0_56, %c0_57], %27 {strides = array<i32>} : memref<128x128xf32, #tpu.memory_space<vmem>>, vector<128x128xf32>,
    return
  }
}

</mosaic_0001>

<llo_original>
// kernel: tpu_custom_call.1
$region0: #{tpu_custom_call.1}
  #allocation0 [shape = 'u32[]', space=smem, size = 0x4, offset = 0x4, fixed_abs, tag = 'smem constant byte address 0x4 - core index']
  #allocation1 [shape = 'u32[144,128]{1,0:T(1,128)}', space=vmem, size = 0x12000, scoped, tag = 'internal scratch']
  #allocation2 [shape = 'bf16[2,10,10,32]{3,2,1,0:T(8,128)(2,1)}', space=vmem, size = 0x14000, scoped, tag = 'scratch operand']
  %s0 = inlined_call_operand.vmem [shape: bf16[2,8,8,32], index: 0, kind: input, shape index: {}]
  %s1 = inlined_call_operand.vmem [shape: bf16[288,64], index: 1, kind: input, shape index: {}]
  %s2 = inlined_call_operand.vmem [shape: f32[1,64], index: 2, kind: input, shape index: {}]
  %s3 = inlined_call_operand.vmem [shape: bf16[64,128], index: 3, kind: input, shape index: {}]
  %s4 = inlined_call_operand.vmem [shape: f32[1,128], index: 4, kind: input, shape index: {}]
  %s5 = inlined_call_operand.hbm [shape: f32[128,128], index: 5, kind: output, shape index: {}]
  %s6 = sld [smem:[#allocation0]]
  $region30: #{tpu_custom_call.1} parent=0
    _
  %s8 = ssub.s32 1, %s6
  %s9 = scalar_select 0, %s8, %s6
  $region1: #{tpu_custom_call.1} parent=0
    #allocation3 [shape = 'u8[65536]{0}', space=vmem, size = 0x10000, scoped, tag = 'output window, operand 0, single buffered']
    #allocation4 [shape = 's32[1]{0}', space=sflag, size = 0x4, scoped, tag = 'scoped memory for tpu_custom_call.1']
    %10 = vsyncpa [#allocation4], 0
    // Predicated region
    $region2: #{tpu_custom_call.1} parent=1 // pred_check
      _
    $region3: #{tpu_custom_call.1} parent=1 // pred_check_branch
      %12 = sbr.rel (0) target = $region5
    $region4: #{tpu_custom_call.1} parent=1 // pred_region
      _
    $region5: #{tpu_custom_call.1} parent=1 // pred_fallthru
      _
    // Predicated region
    $region6: #{tpu_custom_call.1} parent=1 // pred_check
      _
    $region7: #{tpu_custom_call.1} parent=1 // pred_check_branch
      %14 = sbr.rel (0) target = $region9
    $region8: #{tpu_custom_call.1} parent=1 // pred_region
      _
    $region9: #{tpu_custom_call.1} parent=1 // pred_fallthru
      _
    // Predicated region
    $region10: #{tpu_custom_call.1} parent=1 // pred_check
      _
    $region11: #{tpu_custom_call.1} parent=1 // pred_check_branch
      %16 = sbr.rel (0) target = $region13
    $region12: #{tpu_custom_call.1} parent=1 // pred_region
      _
    $region13: #{tpu_custom_call.1} parent=1 // pred_fallthru
      _
    // Predicated region
    $region14: #{tpu_custom_call.1} parent=1 // pred_check
      _
    $region15: #{tpu_custom_call.1} parent=1 // pred_check_branch
      %18 = sbr.rel (0) target = $region17
    $region16: #{tpu_custom_call.1} parent=1 // pred_region
      _
    $region17: #{tpu_custom_call.1} parent=1 // pred_fallthru
      _
    // Predicated region
    $region18: #{tpu_custom_call.1} parent=1 // pred_check
      _
    $region19: #{tpu_custom_call.1} parent=1 // pred_check_branch
      %20 = sbr.rel (0) target = $region21
    $region20: #{tpu_custom_call.1} parent=1 // pred_region
      _
    $region21: #{tpu_custom_call.1} parent=1 // pred_fallthru
      _
    %vm22 = vcmask 257024
    %23 = vst.msk [vmem:[#allocation2] sm:$0xf] %vm22, 0
    %vm24 = vcmask 253952
    %25 = vst.msk [vmem:[#allocation2 + $0x4] sm:$0x1] %vm24, 0
    %26 = vst.msk [vmem:[#allocation2 + $0x8] sm:$0xf] %vm22, 0
    %27 = vst.msk [vmem:[#allocation2 + $0xc] sm:$0x1] %vm24, 0
    %28 = vst.msk [vmem:[#allocation2 + $0x10] sm:$0xf] %vm22, 0
    %29 = vst.msk [vmem:[#allocation2 + $0x14] sm:$0x1] %vm24, 0
    %30 = vst.msk [vmem:[#allocation2 + $0x18] sm:$0xf] %vm22, 0
    %31 = vst.msk [vmem:[#allocation2 + $0x1c] sm:$0x1] %vm24, 0
    %32 = vst.msk [vmem:[#allocation2 + $0x20] sm:$0xf] %vm22, 0
    %33 = vst.msk [vmem:[#allocation2 + $0x24] sm:$0x1] %vm24, 0
    %34 = vst.msk [vmem:[#allocation2 + $0x28] sm:$0xf] %vm22, 0
    %35 = vst.msk [vmem:[#allocation2 + $0x2c] sm:$0x1] %vm24, 0
    %36 = vst.msk [vmem:[#allocation2 + $0x30] sm:$0xf] %vm22, 0
    %37 = vst.msk [vmem:[#allocation2 + $0x34] sm:$0x1] %vm24, 0
    %38 = vst.msk [vmem:[#allocation2 + $0x38] sm:$0xf] %vm22, 0
    %39 = vst.msk [vmem:[#allocation2 + $0x3c] sm:$0x1] %vm24, 0
    %40 = vst.msk [vmem:[#allocation2 + $0x40] sm:$0xf] %vm22, 0
    %41 = vst.msk [vmem:[#allocation2 + $0x44] sm:$0x1] %vm24, 0
    %42 = vst.msk [vmem:[#allocation2 + $0x48] sm:$0xf] %vm22, 0
    %43 = vst.msk [vmem:[#allocation2 + $0x4c] sm:$0x1] %vm24, 0
    %44 = vst.msk [vmem:[#allocation2 + $0x50] sm:$0xf] %vm22, 0
    %45 = vst.msk [vmem:[#allocation2 + $0x54] sm:$0x1] %vm24, 0
    %46 = vst.msk [vmem:[#allocation2 + $0x58] sm:$0xf] %vm22, 0
    %47 = vst.msk [vmem:[#allocation2 + $0x5c] sm:$0x1] %vm24, 0
    %48 = vst.msk [vmem:[#allocation2 + $0x60] sm:$0xf] %vm22, 0
    %49 = vst.msk [vmem:[#allocation2 + $0x64] sm:$0x1] %vm24, 0
    %50 = vst.msk [vmem:[#allocation2 + $0x68] sm:$0xf] %vm22, 0
    %51 = vst.msk [vmem:[#allocation2 + $0x6c] sm:$0x1] %vm24, 0
    %52 = vst.msk [vmem:[#allocation2 + $0x70] sm:$0xf] %vm22, 0
    %53 = vst.msk [vmem:[#allocation2 + $0x74] sm:$0x1] %vm24, 0
    %54 = vst.msk [vmem:[#allocation2 + $0x78] sm:$0xf] %vm22, 0
    %55 = vst.msk [vmem:[#allocation2 + $0x7c] sm:$0x1] %vm24, 0
    %56 = vst.msk [vmem:[#allocation2 + $0x80] sm:$0xf] %vm22, 0
    %57 = vst.msk [vmem:[#allocation2 + $0x84] sm:$0x1] %vm24, 0
    %58 = vst.msk [vmem:[#allocation2 + $0x88] sm:$0xf] %vm22, 0
    %59 = vst.msk [vmem:[#allocation2 + $0x8c] sm:$0x1] %vm24, 0
    %60 = vst.msk [vmem:[#allocation2 + $0x90] sm:$0xf] %vm22, 0
    %61 = vst.msk [vmem:[#allocation2 + $0x94] sm:$0x1] %vm24, 0
    %62 = vst.msk [vmem:[#allocation2 + $0x98] sm:$0xf] %vm22, 0
    %63 = vst.msk [vmem:[#allocation2 + $0x9c] sm:$0x1] %vm24, 0
    %v64 = vld [vmem:[%s0] sm:$0xf]
    %v65 = vld [vmem:[%s0 + $0x4] sm:$0xf]
    %v66 = vld [vmem:[%s0 + $0x8] sm:$0xf]
    %v67 = vld [vmem:[%s0 + $0xc] sm:$0xf]
    %v68 = vld [vmem:[%s0 + $0x10] sm:$0xf]
    %v69 = vld [vmem:[%s0 + $0x14] sm:$0xf]
    %v70 = vld [vmem:[%s0 + $0x18] sm:$0xf]
    %v71 = vld [vmem:[%s0 + $0x1c] sm:$0xf]
    %v72 = vld [vmem:[%s0 + $0x20] sm:$0xf]
    %v73 = vld [vmem:[%s0 + $0x24] sm:$0xf]
    %v74 = vld [vmem:[%s0 + $0x28] sm:$0xf]
    %v75 = vld [vmem:[%s0 + $0x2c] sm:$0xf]
    %v76 = vld [vmem:[%s0 + $0x30] sm:$0xf]
    %v77 = vld [vmem:[%s0 + $0x34] sm:$0xf]
    %v78 = vld [vmem:[%s0 + $0x38] sm:$0xf]
    %v79 = vld [vmem:[%s0 + $0x3c] sm:$0xf]
    %v81 = vshrl.u32 %v64, 16
    %v83 = vrot.slane %v81, 7
    %v84 = vshll.u32 %v64, 16
    %v86 = vor.u32 %v83, %v84
    %v87 = vrot.slane %v83, 4
    %v89 = vshrl.u32 %v65, 16
    %v91 = vrot.slane %v89, 7
    %v92 = vshll.u32 %v65, 16
    %v94 = vor.u32 %v91, %v92
    %v95 = vrot.slane %v91, 4
    %v97 = vshrl.u32 %v66, 16
    %v99 = vrot.slane %v97, 7
    %v100 = vshll.u32 %v66, 16
    %v102 = vor.u32 %v99, %v100
    %v103 = vrot.slane %v99, 4
    %v105 = vshrl.u32 %v67, 16
    %v107 = vrot.slane %v105, 7
    %v108 = vshll.u32 %v67, 16
    %v110 = vor.u32 %v107, %v108
    %v111 = vrot.slane %v107, 4
    %v113 = vshrl.u32 %v68, 16
    %v115 = vrot.slane %v113, 7
    %v116 = vshll.u32 %v68, 16
    %v118 = vor.u32 %v115, %v116
    %v119 = vrot.slane %v115, 4
    %v121 = vshrl.u32 %v69, 16
    %v123 = vrot.slane %v121, 7
    %v124 = vshll.u32 %v69, 16
    %v126 = vor.u32 %v123, %v124
    %v127 = vrot.slane %v123, 4
    %v129 = vshrl.u32 %v70, 16
    %v131 = vrot.slane %v129, 7
    %v132 = vshll.u32 %v70, 16
    %v134 = vor.u32 %v131, %v132
    %v135 = vrot.slane %v131, 4
    %v137 = vshrl.u32 %v71, 16
    %v139 = vrot.slane %v137, 7
    %v140 = vshll.u32 %v71, 16
    %v142 = vor.u32 %v139, %v140
    %v143 = vrot.slane %v139, 4
    %v145 = vshrl.u32 %v72, 16
    %v147 = vrot.slane %v145, 7
    %v148 = vshll.u32 %v72, 16
    %v150 = vor.u32 %v147, %v148
    %v151 = vrot.slane %v147, 4
    %v153 = vshrl.u32 %v73, 16
    %v155 = vrot.slane %v153, 7
    %v156 = vshll.u32 %v73, 16
    %v158 = vor.u32 %v155, %v156
    %v159 = vrot.slane %v155, 4
    %v161 = vshrl.u32 %v74, 16
    %v163 = vrot.slane %v161, 7
    %v164 = vshll.u32 %v74, 16
    %v166 = vor.u32 %v163, %v164
    %v167 = vrot.slane %v163, 4
    %v169 = vshrl.u32 %v75, 16
    %v171 = vrot.slane %v169, 7
    %v172 = vshll.u32 %v75, 16
    %v174 = vor.u32 %v171, %v172
    %v175 = vrot.slane %v171, 4
    %v177 = vshrl.u32 %v76, 16
    %v179 = vrot.slane %v177, 7
    %v180 = vshll.u32 %v76, 16
    %v182 = vor.u32 %v179, %v180
    %v183 = vrot.slane %v179, 4
    %v185 = vshrl.u32 %v77, 16
    %v187 = vrot.slane %v185, 7
    %v188 = vshll.u32 %v77, 16
    %v190 = vor.u32 %v187, %v188
    %v191 = vrot.slane %v187, 4
    %v193 = vshrl.u32 %v78, 16
    %v195 = vrot.slane %v193, 7
    %v196 = vshll.u32 %v78, 16
    %v198 = vor.u32 %v195, %v196
    %v199 = vrot.slane %v195, 4
    %v201 = vshrl.u32 %v79, 16
    %v203 = vrot.slane %v201, 7
    %v204 = vshll.u32 %v79, 16
    %v206 = vor.u32 %v203, %v204
    %v207 = vrot.slane %v203, 4
    %s240 = scalar_lea.vmem [#allocation2], 8
    %vm241 = vcmask 257024
    %vm242 = vsmask.f32 7938
    %vm243 = vmand %vm241, %vm242
    %v244 = vld [vmem:[%s240] sm:$0xf]
    %v245 = vsel %vm243, %v86, %v244
    %246 = vst [vmem:[%s240] sm:$0xf] %v245
    %vm247 = vcmask 253952
    %vm248 = vsmask.f32 256
    %vm249 = vmand %vm247, %vm248
    %v250 = vld [vmem:[%s240 + $0x4] sm:$0x1]
    %v251 = vsel %vm249, %v87, %v250
    %252 = vst [vmem:[%s240 + $0x4] sm:$0x1] %v251
    %v253 = vld [vmem:[%s240 + $0x8] sm:$0xf]
    %v254 = vsel %vm243, %v94, %v253
    %255 = vst [vmem:[%s240 + $0x8] sm:$0xf] %v254
    %v256 = vld [vmem:[%s240 + $0xc] sm:$0x1]
    %v257 = vsel %vm249, %v95, %v256
    %258 = vst [vmem:[%s240 + $0xc] sm:$0x1] %v257
    %v259 = vld [vmem:[%s240 + $0x10] sm:$0xf]
    %v260 = vsel %vm243, %v102, %v259
    %261 = vst [vmem:[%s240 + $0x10] sm:$0xf] %v260
    %v262 = vld [vmem:[%s240 + $0x14] sm:$0x1]
    %v263 = vsel %vm249, %v103, %v262
    %264 = vst [vmem:[%s240 + $0x14] sm:$0x1] %v263
    %v265 = vld [vmem:[%s240 + $0x18] sm:$0xf]
    %v266 = vsel %vm243, %v110, %v265
    %267 = vst [vmem:[%s240 + $0x18] sm:$0xf] %v266
    %v268 = vld [vmem:[%s240 + $0x1c] sm:$0x1]
    %v269 = vsel %vm249, %v111, %v268
    %270 = vst [vmem:[%s240 + $0x1c] sm:$0x1] %v269
    %v271 = vld [vmem:[%s240 + $0x20] sm:$0xf]
    %v272 = vsel %vm243, %v118, %v271
    %273 = vst [vmem:[%s240 + $0x20] sm:$0xf] %v272
    %v274 = vld [vmem:[%s240 + $0x24] sm:$0x1]
    %v275 = vsel %vm249, %v119, %v274
    %276 = vst [vmem:[%s240 + $0x24] sm:$0x1] %v275
    %v277 = vld [vmem:[%s240 + $0x28] sm:$0xf]
    %v278 = vsel %vm243, %v126, %v277
    %279 = vst [vmem:[%s240 + $0x28] sm:$0xf] %v278
    %v280 = vld [vmem:[%s240 + $0x2c] sm:$0x1]
    %v281 = vsel %vm249, %v127, %v280
    %282 = vst [vmem:[%s240 + $0x2c] sm:$0x1] %v281
    %v283 = vld [vmem:[%s240 + $0x30] sm:$0xf]
    %v284 = vsel %vm243, %v134, %v283
    %285 = vst [vmem:[%s240 + $0x30] sm:$0xf] %v284
    %v286 = vld [vmem:[%s240 + $0x34] sm:$0x1]
    %v287 = vsel %vm249, %v135, %v286
    %288 = vst [vmem:[%s240 + $0x34] sm:$0x1] %v287
    %v289 = vld [vmem:[%s240 + $0x38] sm:$0xf]
    %v290 = vsel %vm243, %v142, %v289
    %291 = vst [vmem:[%s240 + $0x38] sm:$0xf] %v290
    %v292 = vld [vmem:[%s240 + $0x3c] sm:$0x1]
    %v293 = vsel %vm249, %v143, %v292
    %294 = vst [vmem:[%s240 + $0x3c] sm:$0x1] %v293
    %v295 = vld [vmem:[%s240 + $0x50] sm:$0xf]
    %v296 = vsel %vm243, %v150, %v295
    %297 = vst [vmem:[%s240 + $0x50] sm:$0xf] %v296
    %v298 = vld [vmem:[%s240 + $0x54] sm:$0x1]
    %v299 = vsel %vm249, %v151, %v298
    %300 = vst [vmem:[%s240 + $0x54] sm:$0x1] %v299
    %v301 = vld [vmem:[%s240 + $0x58] sm:$0xf]
    %v302 = vsel %vm243, %v158, %v301
    %303 = vst [vmem:[%s240 + $0x58] sm:$0xf] %v302
    %v304 = vld [vmem:[%s240 + $0x5c] sm:$0x1]
    %v305 = vsel %vm249, %v159, %v304
    %306 = vst [vmem:[%s240 + $0x5c] sm:$0x1] %v305
    %v307 = vld [vmem:[%s240 + $0x60] sm:$0xf]
    %v308 = vsel %vm243, %v166, %v307
    %309 = vst [vmem:[%s240 + $0x60] sm:$0xf] %v308
    %v310 = vld [vmem:[%s240 + $0x64] sm:$0x1]
    %v311 = vsel %vm249, %v167, %v310
    %312 = vst [vmem:[%s240 + $0x64] sm:$0x1] %v311
    %v313 = vld [vmem:[%s240 + $0x68] sm:$0xf]
    %v314 = vsel %vm243, %v174, %v313
    %315 = vst [vmem:[%s240 + $0x68] sm:$0xf] %v314
    %v316 = vld [vmem:[%s240 + $0x6c] sm:$0x1]
    %v317 = vsel %vm249, %v175, %v316
    %318 = vst [vmem:[%s240 + $0x6c] sm:$0x1] %v317
    %v319 = vld [vmem:[%s240 + $0x70] sm:$0xf]
    %v320 = vsel %vm243, %v182, %v319
    %321 = vst [vmem:[%s240 + $0x70] sm:$0xf] %v320
    %v322 = vld [vmem:[%s240 + $0x74] sm:$0x1]
    %v323 = vsel %vm249, %v183, %v322
    %324 = vst [vmem:[%s240 + $0x74] sm:$0x1] %v323
    %v325 = vld [vmem:[%s240 + $0x78] sm:$0xf]
    %v326 = vsel %vm243, %v190, %v325
    %327 = vst [vmem:[%s240 + $0x78] sm:$0xf] %v326
    %v328 = vld [vmem:[%s240 + $0x7c] sm:$0x1]
    %v329 = vsel %vm249, %v191, %v328
    %330 = vst [vmem:[%s240 + $0x7c] sm:$0x1] %v329
    %v331 = vld [vmem:[%s240 + $0x80] sm:$0xf]
    %v332 = vsel %vm243, %v198, %v331
    %333 = vst [vmem:[%s240 + $0x80] sm:$0xf] %v332
    %v334 = vld [vmem:[%s240 + $0x84] sm:$0x1]
    %v335 = vsel %vm249, %v199, %v334
    %336 = vst [vmem:[%s240 + $0x84] sm:$0x1] %v335
    %v337 = vld [vmem:[%s240 + $0x88] sm:$0xf]
    %v338 = vsel %vm243, %v206, %v337
    %339 = vst [vmem:[%s240 + $0x88] sm:$0xf] %v338
    %v340 = vld [vmem:[%s240 + $0x8c] sm:$0x1]
    %v341 = vsel %vm249, %v207, %v340
    %342 = vst [vmem:[%s240 + $0x8c] sm:$0x1] %v341
    %v343 = vld [vmem:[#allocation2] sm:$0xf]
    %v344 = vld [vmem:[#allocation2 + $0x8] sm:$0xf]
    %v345 = vld [vmem:[#allocation2 + $0x10] sm:$0xf]
    %v346 = vld [vmem:[#allocation2 + $0x18] sm:$0xf]
    %v347 = vld [vmem:[#allocation2 + $0x20] sm:$0xf]
    %v348 = vld [vmem:[#allocation2 + $0x28] sm:$0xf]
    %v349 = vld [vmem:[#allocation2 + $0x30] sm:$0xf]
    %v350 = vld [vmem:[#allocation2 + $0x38] sm:$0xf]
    %v351 = vld [vmem:[#allocation2 + $0x50] sm:$0xf]
    %v352 = vld [vmem:[#allocation2 + $0x58] sm:$0xf]
    %v353 = vld [vmem:[#allocation2 + $0x60] sm:$0xf]
    %v354 = vld [vmem:[#allocation2 + $0x68] sm:$0xf]
    %v355 = vld [vmem:[#allocation2 + $0x70] sm:$0xf]
    %v356 = vld [vmem:[#allocation2 + $0x78] sm:$0xf]
    %v357 = vld [vmem:[#allocation2 + $0x80] sm:$0xf]
    %v358 = vld [vmem:[#allocation2 + $0x88] sm:$0xf]
    %v359 = vld [vmem:[#allocation2 + $0x4] sm:$0x1]
    %v360 = vld [vmem:[#allocation2 + $0xc] sm:$0x1]
    %v361 = vld [vmem:[#allocation2 + $0x14] sm:$0x1]
    %v362 = vld [vmem:[#allocation2 + $0x1c] sm:$0x1]
    %v363 = vld [vmem:[#allocation2 + $0x24] sm:$0x1]
    %v364 = vld [vmem:[#allocation2 + $0x2c] sm:$0x1]
    %v365 = vld [vmem:[#allocation2 + $0x34] sm:$0x1]
    %v366 = vld [vmem:[#allocation2 + $0x3c] sm:$0x1]
    %v367 = vld [vmem:[#allocation2 + $0x54] sm:$0x1]
    %v368 = vld [vmem:[#allocation2 + $0x5c] sm:$0x1]
    %v369 = vld [vmem:[#allocation2 + $0x64] sm:$0x1]
    %v370 = vld [vmem:[#allocation2 + $0x6c] sm:$0x1]
    %v371 = vld [vmem:[#allocation2 + $0x74] sm:$0x1]
    %v372 = vld [vmem:[#allocation2 + $0x7c] sm:$0x1]
    %v373 = vld [vmem:[#allocation2 + $0x84] sm:$0x1]
    %v374 = vld [vmem:[#allocation2 + $0x8c] sm:$0x1]
    %v375 = vld [vmem:[#allocation2] sm:$0xe]
    %v376 = vld [vmem:[#allocation2 + $0x8] sm:$0xe]
    %v377 = vld [vmem:[#allocation2 + $0x10] sm:$0xe]
    %v378 = vld [vmem:[#allocation2 + $0x18] sm:$0xe]
    %v379 = vld [vmem:[#allocation2 + $0x20] sm:$0xe]
    %v380 = vld [vmem:[#allocation2 + $0x28] sm:$0xe]
    %v381 = vld [vmem:[#allocation2 + $0x30] sm:$0xe]
    %v382 = vld [vmem:[#allocation2 + $0x38] sm:$0xe]
    %v383 = vld [vmem:[#allocation2 + $0x50] sm:$0xe]
    %v384 = vld [vmem:[#allocation2 + $0x58] sm:$0xe]
    %v385 = vld [vmem:[#allocation2 + $0x60] sm:$0xe]
    %v386 = vld [vmem:[#allocation2 + $0x68] sm:$0xe]
    %v387 = vld [vmem:[#allocation2 + $0x70] sm:$0xe]
    %v388 = vld [vmem:[#allocation2 + $0x78] sm:$0xe]
    %v389 = vld [vmem:[#allocation2 + $0x80] sm:$0xe]
    %v390 = vld [vmem:[#allocation2 + $0x88] sm:$0xe]
    %v391 = vld [vmem:[%s240] sm:$0xf]
    %v392 = vld [vmem:[%s240 + $0x8] sm:$0xf]
    %v393 = vld [vmem:[%s240 + $0x10] sm:$0xf]
    %v394 = vld [vmem:[%s240 + $0x18] sm:$0xf]
    %v395 = vld [vmem:[%s240 + $0x20] sm:$0xf]
    %v396 = vld [vmem:[%s240 + $0x28] sm:$0xf]
    %v397 = vld [vmem:[%s240 + $0x30] sm:$0xf]
    %v398 = vld [vmem:[%s240 + $0x38] sm:$0xf]
    %v399 = vld [vmem:[%s240 + $0x50] sm:$0xf]
    %v400 = vld [vmem:[%s240 + $0x58] sm:$0xf]
    %v401 = vld [vmem:[%s240 + $0x60] sm:$0xf]
    %v402 = vld [vmem:[%s240 + $0x68] sm:$0xf]
    %v403 = vld [vmem:[%s240 + $0x70] sm:$0xf]
    %v404 = vld [vmem:[%s240 + $0x78] sm:$0xf]
    %v405 = vld [vmem:[%s240 + $0x80] sm:$0xf]
    %v406 = vld [vmem:[%s240 + $0x88] sm:$0xf]
    %v407 = vld [vmem:[%s240 + $0x4] sm:$0x1]
    %v408 = vld [vmem:[%s240 + $0xc] sm:$0x1]
    %v409 = vld [vmem:[%s240 + $0x14] sm:$0x1]
    %v410 = vld [vmem:[%s240 + $0x1c] sm:$0x1]
    %v411 = vld [vmem:[%s240 + $0x24] sm:$0x1]
    %v412 = vld [vmem:[%s240 + $0x2c] sm:$0x1]
    %v413 = vld [vmem:[%s240 + $0x34] sm:$0x1]
    %v414 = vld [vmem:[%s240 + $0x3c] sm:$0x1]
    %v415 = vld [vmem:[%s240 + $0x54] sm:$0x1]
    %v416 = vld [vmem:[%s240 + $0x5c] sm:$0x1]
    %v417 = vld [vmem:[%s240 + $0x64] sm:$0x1]
    %v418 = vld [vmem:[%s240 + $0x6c] sm:$0x1]
    %v419 = vld [vmem:[%s240 + $0x74] sm:$0x1]
    %v420 = vld [vmem:[%s240 + $0x7c] sm:$0x1]
    %v421 = vld [vmem:[%s240 + $0x84] sm:$0x1]
    %v422 = vld [vmem:[%s240 + $0x8c] sm:$0x1]
    %v423 = vld [vmem:[%s240] sm:$0xe]
    %v424 = vld [vmem:[%s240 + $0x8] sm:$0xe]
    %v425 = vld [vmem:[%s240 + $0x10] sm:$0xe]
    %v426 = vld [vmem:[%s240 + $0x18] sm:$0xe]
    %v427 = vld [vmem:[%s240 + $0x20] sm:$0xe]
    %v428 = vld [vmem:[%s240 + $0x28] sm:$0xe]
    %v429 = vld [vmem:[%s240 + $0x30] sm:$0xe]
    %v430 = vld [vmem:[%s240 + $0x38] sm:$0xe]
    %v431 = vld [vmem:[%s240 + $0x50] sm:$0xe]
    %v432 = vld [vmem:[%s240 + $0x58] sm:$0xe]
    %v433 = vld [vmem:[%s240 + $0x60] sm:$0xe]
    %v434 = vld [vmem:[%s240 + $0x68] sm:$0xe]
    %v435 = vld [vmem:[%s240 + $0x70] sm:$0xe]
    %v436 = vld [vmem:[%s240 + $0x78] sm:$0xe]
    %v437 = vld [vmem:[%s240 + $0x80] sm:$0xe]
    %v438 = vld [vmem:[%s240 + $0x88] sm:$0xe]
    %s439 = scalar_lea.vmem [#allocation2], 16
    %v440 = vld [vmem:[%s439] sm:$0xf]
    %v441 = vld [vmem:[%s439 + $0x8] sm:$0xf]
    %v442 = vld [vmem:[%s439 + $0x10] sm:$0xf]
    %v443 = vld [vmem:[%s439 + $0x18] sm:$0xf]
    %v444 = vld [vmem:[%s439 + $0x20] sm:$0xf]
    %v445 = vld [vmem:[%s439 + $0x28] sm:$0xf]
    %v446 = vld [vmem:[%s439 + $0x30] sm:$0xf]
    %v447 = vld [vmem:[%s439 + $0x38] sm:$0xf]
    %v448 = vld [vmem:[%s439 + $0x50] sm:$0xf]
    %v449 = vld [vmem:[%s439 + $0x58] sm:$0xf]
    %v450 = vld [vmem:[%s439 + $0x60] sm:$0xf]
    %v451 = vld [vmem:[%s439 + $0x68] sm:$0xf]
    %v452 = vld [vmem:[%s439 + $0x70] sm:$0xf]
    %v453 = vld [vmem:[%s439 + $0x78] sm:$0xf]
    %v454 = vld [vmem:[%s439 + $0x80] sm:$0xf]
    %v455 = vld [vmem:[%s439 + $0x88] sm:$0xf]
    %v456 = vld [vmem:[%s439 + $0x4] sm:$0x1]
    %v457 = vld [vmem:[%s439 + $0xc] sm:$0x1]
    %v458 = vld [vmem:[%s439 + $0x14] sm:$0x1]
    %v459 = vld [vmem:[%s439 + $0x1c] sm:$0x1]
    %v460 = vld [vmem:[%s439 + $0x24] sm:$0x1]
    %v461 = vld [vmem:[%s439 + $0x2c] sm:$0x1]
    %v462 = vld [vmem:[%s439 + $0x34] sm:$0x1]
    %v463 = vld [vmem:[%s439 + $0x3c] sm:$0x1]
    %v464 = vld [vmem:[%s439 + $0x54] sm:$0x1]
    %v465 = vld [vmem:[%s439 + $0x5c] sm:$0x1]
    %v466 = vld [vmem:[%s439 + $0x64] sm:$0x1]
    %v467 = vld [vmem:[%s439 + $0x6c] sm:$0x1]
    %v468 = vld [vmem:[%s439 + $0x74] sm:$0x1]
    %v469 = vld [vmem:[%s439 + $0x7c] sm:$0x1]
    %v470 = vld [vmem:[%s439 + $0x84] sm:$0x1]
    %v471 = vld [vmem:[%s439 + $0x8c] sm:$0x1]
    %v472 = vld [vmem:[%s439] sm:$0xe]
    %v473 = vld [vmem:[%s439 + $0x8] sm:$0xe]
    %v474 = vld [vmem:[%s439 + $0x10] sm:$0xe]
    %v475 = vld [vmem:[%s439 + $0x18] sm:$0xe]
    %v476 = vld [vmem:[%s439 + $0x20] sm:$0xe]
    %v477 = vld [vmem:[%s439 + $0x28] sm:$0xe]
    %v478 = vld [vmem:[%s439 + $0x30] sm:$0xe]
    %v479 = vld [vmem:[%s439 + $0x38] sm:$0xe]
    %v480 = vld [vmem:[%s439 + $0x50] sm:$0xe]
    %v481 = vld [vmem:[%s439 + $0x58] sm:$0xe]
    %v482 = vld [vmem:[%s439 + $0x60] sm:$0xe]
    %v483 = vld [vmem:[%s439 + $0x68] sm:$0xe]
    %v484 = vld [vmem:[%s439 + $0x70] sm:$0xe]
    %v485 = vld [vmem:[%s439 + $0x78] sm:$0xe]
    %v486 = vld [vmem:[%s439 + $0x80] sm:$0xe]
    %v487 = vld [vmem:[%s439 + $0x88] sm:$0xe]
    %v520 = vunpack.c.l.b16 %v343
    %v521 = vunpack.c.l.b16 %v359
    %v522 = vunpack.c.l.b16 %v344
    %v523 = vunpack.c.l.b16 %v360
    %v524 = vunpack.c.l.b16 %v345
    %v525 = vunpack.c.l.b16 %v361
    %v526 = vunpack.c.l.b16 %v346
    %v527 = vunpack.c.l.b16 %v362
    %v528 = vunpack.c.l.b16 %v347
    %v529 = vunpack.c.l.b16 %v363
    %v530 = vunpack.c.l.b16 %v348
    %v531 = vunpack.c.l.b16 %v364
    %v532 = vunpack.c.l.b16 %v349
    %v533 = vunpack.c.l.b16 %v365
    %v534 = vunpack.c.l.b16 %v350
    %v535 = vunpack.c.l.b16 %v366
    %v536 = vunpack.c.l.b16 %v351
    %v537 = vunpack.c.l.b16 %v367
    %v538 = vunpack.c.l.b16 %v352
    %v539 = vunpack.c.l.b16 %v368
    %v540 = vunpack.c.l.b16 %v353
    %v541 = vunpack.c.l.b16 %v369
    %v542 = vunpack.c.l.b16 %v354
    %v543 = vunpack.c.l.b16 %v370
    %v544 = vunpack.c.l.b16 %v355
    %v545 = vunpack.c.l.b16 %v371
    %v546 = vunpack.c.l.b16 %v356
    %v547 = vunpack.c.l.b16 %v372
    %v548 = vunpack.c.l.b16 %v357
    %v549 = vunpack.c.l.b16 %v373
    %v550 = vunpack.c.l.b16 %v358
    %v551 = vunpack.c.l.b16 %v374
    %v552 = vpack.c.b16 %v521, %v520
    %v553 = vpack.c.b16 %v523, %v522
    %v554 = vpack.c.b16 %v525, %v524
    %v555 = vpack.c.b16 %v527, %v526
    %v556 = vpack.c.b16 %v529, %v528
    %v557 = vpack.c.b16 %v531, %v530
    %v558 = vpack.c.b16 %v533, %v532
    %v559 = vpack.c.b16 %v535, %v534
    %v560 = vpack.c.b16 %v537, %v536
    %v561 = vpack.c.b16 %v539, %v538
    %v562 = vpack.c.b16 %v541, %v540
    %v563 = vpack.c.b16 %v543, %v542
    %v564 = vpack.c.b16 %v545, %v544
    %v565 = vpack.c.b16 %v547, %v546
    %v566 = vpack.c.b16 %v549, %v548
    %v567 = vpack.c.b16 %v551, %v550
    %v569 = vshrl.u32 %v552, 16
    %v571 = vshll.u32 %v552, 16
    %v573 = vrot.slane %v571, 1
    %v574 = vor.u32 %v569, %v573
    %v576 = vshrl.u32 %v553, 16
    %v578 = vshll.u32 %v553, 16
    %v580 = vrot.slane %v578, 1
    %v581 = vor.u32 %v576, %v580
    %v583 = vshrl.u32 %v554, 16
    %v585 = vshll.u32 %v554, 16
    %v587 = vrot.slane %v585, 1
    %v588 = vor.u32 %v583, %v587
    %v590 = vshrl.u32 %v555, 16
    %v592 = vshll.u32 %v555, 16
    %v594 = vrot.slane %v592, 1
    %v595 = vor.u32 %v590, %v594
    %v597 = vshrl.u32 %v556, 16
    %v599 = vshll.u32 %v556, 16
    %v601 = vrot.slane %v599, 1
    %v602 = vor.u32 %v597, %v601
    %v604 = vshrl.u32 %v557, 16
    %v606 = vshll.u32 %v557, 16
    %v608 = vrot.slane %v606, 1
    %v609 = vor.u32 %v604, %v608
    %v611 = vshrl.u32 %v558, 16
    %v613 = vshll.u32 %v558, 16
    %v615 = vrot.slane %v613, 1
    %v616 = vor.u32 %v611, %v615
    %v618 = vshrl.u32 %v559, 16
    %v620 = vshll.u32 %v559, 16
    %v622 = vrot.slane %v620, 1
    %v623 = vor.u32 %v618, %v622
    %v625 = vshrl.u32 %v560, 16
    %v627 = vshll.u32 %v560, 16
    %v629 = vrot.slane %v627, 1
    %v630 = vor.u32 %v625, %v629
    %v632 = vshrl.u32 %v561, 16
    %v634 = vshll.u32 %v561, 16
    %v636 = vrot.slane %v634, 1
    %v637 = vor.u32 %v632, %v636
    %v639 = vshrl.u32 %v562, 16
    %v641 = vshll.u32 %v562, 16
    %v643 = vrot.slane %v641, 1
    %v644 = vor.u32 %v639, %v643
    %v646 = vshrl.u32 %v563, 16
    %v648 = vshll.u32 %v563, 16
    %v650 = vrot.slane %v648, 1
    %v651 = vor.u32 %v646, %v650
    %v653 = vshrl.u32 %v564, 16
    %v655 = vshll.u32 %v564, 16
    %v657 = vrot.slane %v655, 1
    %v658 = vor.u32 %v653, %v657
    %v660 = vshrl.u32 %v565, 16
    %v662 = vshll.u32 %v565, 16
    %v664 = vrot.slane %v662, 1
    %v665 = vor.u32 %v660, %v664
    %v667 = vshrl.u32 %v566, 16
    %v669 = vshll.u32 %v566, 16
    %v671 = vrot.slane %v669, 1
    %v672 = vor.u32 %v667, %v671
    %v674 = vshrl.u32 %v567, 16
    %v676 = vshll.u32 %v567, 16
    %v678 = vrot.slane %v676, 1
    %v679 = vor.u32 %v674, %v678
    %680 = vrot.lane.b32.xlu0 %v574, 32
    %v681 = vpop.permute.xlu0 %680
    %682 = vrot.lane.b32.xlu0 %v581, 32
    %v683 = vpop.permute.xlu0 %682
    %684 = vrot.lane.b32.xlu0 %v588, 32
    %v685 = vpop.permute.xlu0 %684
    %686 = vrot.lane.b32.xlu0 %v595, 32
    %v687 = vpop.permute.xlu0 %686
    %688 = vrot.lane.b32.xlu0 %v602, 32
    %v689 = vpop.permute.xlu0 %688
    %690 = vrot.lane.b32.xlu0 %v609, 32
    %v691 = vpop.permute.xlu0 %690
    %692 = vrot.lane.b32.xlu0 %v616, 32
    %v693 = vpop.permute.xlu0 %692
    %694 = vrot.lane.b32.xlu0 %v623, 32
    %v695 = vpop.permute.xlu0 %694
    %696 = vrot.lane.b32.xlu0 %v630, 32
    %v697 = vpop.permute.xlu0 %696
    %698 = vrot.lane.b32.xlu0 %v637, 32
    %v699 = vpop.permute.xlu0 %698
    %700 = vrot.lane.b32.xlu0 %v644, 32
    %v701 = vpop.permute.xlu0 %700
    %702 = vrot.lane.b32.xlu0 %v651, 32
    %v703 = vpop.permute.xlu0 %702
    %704 = vrot.lane.b32.xlu0 %v658, 32
    %v705 = vpop.permute.xlu0 %704
    %706 = vrot.lane.b32.xlu0 %v665, 32
    %v707 = vpop.permute.xlu0 %706
    %708 = vrot.lane.b32.xlu0 %v672, 32
    %v709 = vpop.permute.xlu0 %708
    %710 = vrot.lane.b32.xlu0 %v679, 32
    %v711 = vpop.permute.xlu0 %710
    %v728 = vunpack.c.l.b16 %v375
    %v729 = vunpack.c.l.b16 %v376
    %v730 = vunpack.c.l.b16 %v377
    %v731 = vunpack.c.l.b16 %v378
    %v732 = vunpack.c.l.b16 %v379
    %v733 = vunpack.c.l.b16 %v380
    %v734 = vunpack.c.l.b16 %v381
    %v735 = vunpack.c.l.b16 %v382
    %v736 = vunpack.c.l.b16 %v383
    %v737 = vunpack.c.l.b16 %v384
    %v738 = vunpack.c.l.b16 %v385
    %v739 = vunpack.c.l.b16 %v386
    %v740 = vunpack.c.l.b16 %v387
    %v741 = vunpack.c.l.b16 %v388
    %v742 = vunpack.c.l.b16 %v389
    %v743 = vunpack.c.l.b16 %v390
    %v744 = vpack.c.b16 %v521, %v728
    %v745 = vpack.c.b16 %v523, %v729
    %v746 = vpack.c.b16 %v525, %v730
    %v747 = vpack.c.b16 %v527, %v731
    %v748 = vpack.c.b16 %v529, %v732
    %v749 = vpack.c.b16 %v531, %v733
    %v750 = vpack.c.b16 %v533, %v734
    %v751 = vpack.c.b16 %v535, %v735
    %v752 = vpack.c.b16 %v537, %v736
    %v753 = vpack.c.b16 %v539, %v737
    %v754 = vpack.c.b16 %v541, %v738
    %v755 = vpack.c.b16 %v543, %v739
    %v756 = vpack.c.b16 %v545, %v740
    %v757 = vpack.c.b16 %v547, %v741
    %v758 = vpack.c.b16 %v549, %v742
    %v759 = vpack.c.b16 %v551, %v743
    %v760 = vrot.slane %v744, 1
    %v761 = vrot.slane %v745, 1
    %v762 = vrot.slane %v746, 1
    %v763 = vrot.slane %v747, 1
    %v764 = vrot.slane %v748, 1
    %v765 = vrot.slane %v749, 1
    %v766 = vrot.slane %v750, 1
    %v767 = vrot.slane %v751, 1
    %v768 = vrot.slane %v752, 1
    %v769 = vrot.slane %v753, 1
    %v770 = vrot.slane %v754, 1
    %v771 = vrot.slane %v755, 1
    %v772 = vrot.slane %v756, 1
    %v773 = vrot.slane %v757, 1
    %v774 = vrot.slane %v758, 1
    %v775 = vrot.slane %v759, 1
    %776 = vrot.lane.b32.xlu0 %v760, 64
    %v777 = vpop.permute.xlu0 %776
    %778 = vrot.lane.b32.xlu0 %v761, 64
    %v779 = vpop.permute.xlu0 %778
    %780 = vrot.lane.b32.xlu0 %v762, 64
    %v781 = vpop.permute.xlu0 %780
    %782 = vrot.lane.b32.xlu0 %v763, 64
    %v783 = vpop.permute.xlu0 %782
    %784 = vrot.lane.b32.xlu0 %v764, 64
    %v785 = vpop.permute.xlu0 %784
    %786 = vrot.lane.b32.xlu0 %v765, 64
    %v787 = vpop.permute.xlu0 %786
    %788 = vrot.lane.b32.xlu0 %v766, 64
    %v789 = vpop.permute.xlu0 %788
    %790 = vrot.lane.b32.xlu0 %v767, 64
    %v791 = vpop.permute.xlu0 %790
    %792 = vrot.lane.b32.xlu0 %v768, 64
    %v793 = vpop.permute.xlu0 %792
    %794 = vrot.lane.b32.xlu0 %v769, 64
    %v795 = vpop.permute.xlu0 %794
    %796 = vrot.lane.b32.xlu0 %v770, 64
    %v797 = vpop.permute.xlu0 %796
    %798 = vrot.lane.b32.xlu0 %v771, 64
    %v799 = vpop.permute.xlu0 %798
    %800 = vrot.lane.b32.xlu0 %v772, 64
    %v801 = vpop.permute.xlu0 %800
    %802 = vrot.lane.b32.xlu0 %v773, 64
    %v803 = vpop.permute.xlu0 %802
    %804 = vrot.lane.b32.xlu0 %v774, 64
    %v805 = vpop.permute.xlu0 %804
    %806 = vrot.lane.b32.xlu0 %v775, 64
    %v807 = vpop.permute.xlu0 %806
    %v824 = vunpack.c.l.b16 %v391
    %v825 = vunpack.c.l.b16 %v392
    %v826 = vunpack.c.l.b16 %v393
    %v827 = vunpack.c.l.b16 %v394
    %v828 = vunpack.c.l.b16 %v395
    %v829 = vunpack.c.l.b16 %v396
    %v830 = vunpack.c.l.b16 %v397
    %v831 = vunpack.c.l.b16 %v398
    %v832 = vunpack.c.l.b16 %v399
    %v833 = vunpack.c.l.b16 %v400
    %v834 = vunpack.c.l.b16 %v401
    %v835 = vunpack.c.l.b16 %v402
    %v836 = vunpack.c.l.b16 %v403
    %v837 = vunpack.c.l.b16 %v404
    %v838 = vunpack.c.l.b16 %v405
    %v839 = vunpack.c.l.b16 %v406
    %v840 = vpack.c.b16 %v824, %v824
    %v841 = vpack.c.b16 %v825, %v825
    %v842 = vpack.c.b16 %v826, %v826
    %v843 = vpack.c.b16 %v827, %v827
    %v844 = vpack.c.b16 %v828, %v828
    %v845 = vpack.c.b16 %v829, %v829
    %v846 = vpack.c.b16 %v830, %v830
    %v847 = vpack.c.b16 %v831, %v831
    %v848 = vpack.c.b16 %v832, %v832
    %v849 = vpack.c.b16 %v833, %v833
    %v850 = vpack.c.b16 %v834, %v834
    %v851 = vpack.c.b16 %v835, %v835
    %v852 = vpack.c.b16 %v836, %v836
    %v853 = vpack.c.b16 %v837, %v837
    %v854 = vpack.c.b16 %v838, %v838
    %v855 = vpack.c.b16 %v839, %v839
    %856 = vrot.lane.b32.xlu0 %v840, 96
    %v857 = vpop.permute.xlu0 %856
    %858 = vrot.lane.b32.xlu0 %v841, 96
    %v859 = vpop.permute.xlu0 %858
    %860 = vrot.lane.b32.xlu0 %v842, 96
    %v861 = vpop.permute.xlu0 %860
    %862 = vrot.lane.b32.xlu0 %v843, 96
    %v863 = vpop.permute.xlu0 %862
    %864 = vrot.lane.b32.xlu0 %v844, 96
    %v865 = vpop.permute.xlu0 %864
    %866 = vrot.lane.b32.xlu0 %v845, 96
    %v867 = vpop.permute.xlu0 %866
    %868 = vrot.lane.b32.xlu0 %v846, 96
    %v869 = vpop.permute.xlu0 %868
    %870 = vrot.lane.b32.xlu0 %v847, 96
    %v871 = vpop.permute.xlu0 %870
    %872 = vrot.lane.b32.xlu0 %v848, 96
    %v873 = vpop.permute.xlu0 %872
    %874 = vrot.lane.b32.xlu0 %v849, 96
    %v875 = vpop.permute.xlu0 %874
    %876 = vrot.lane.b32.xlu0 %v850, 96
    %v877 = vpop.permute.xlu0 %876
    %878 = vrot.lane.b32.xlu0 %v851, 96
    %v879 = vpop.permute.xlu0 %878
    %880 = vrot.lane.b32.xlu0 %v852, 96
    %v881 = vpop.permute.xlu0 %880
    %882 = vrot.lane.b32.xlu0 %v853, 96
    %v883 = vpop.permute.xlu0 %882
    %884 = vrot.lane.b32.xlu0 %v854, 96
    %v885 = vpop.permute.xlu0 %884
    %886 = vrot.lane.b32.xlu0 %v855, 96
    %v887 = vpop.permute.xlu0 %886
    %v904 = vunpack.c.l.b16 %v407
    %v905 = vunpack.c.l.b16 %v408
    %v906 = vunpack.c.l.b16 %v409
    %v907 = vunpack.c.l.b16 %v410
    %v908 = vunpack.c.l.b16 %v411
    %v909 = vunpack.c.l.b16 %v412
    %v910 = vunpack.c.l.b16 %v413
    %v911 = vunpack.c.l.b16 %v414
    %v912 = vunpack.c.l.b16 %v415
    %v913 = vunpack.c.l.b16 %v416
    %v914 = vunpack.c.l.b16 %v417
    %v915 = vunpack.c.l.b16 %v418
    %v916 = vunpack.c.l.b16 %v419
    %v917 = vunpack.c.l.b16 %v420
    %v918 = vunpack.c.l.b16 %v421
    %v919 = vunpack.c.l.b16 %v422
    %v920 = vpack.c.b16 %v904, %v824
    %v921 = vpack.c.b16 %v905, %v825
    %v922 = vpack.c.b16 %v906, %v826
    %v923 = vpack.c.b16 %v907, %v827
    %v924 = vpack.c.b16 %v908, %v828
    %v925 = vpack.c.b16 %v909, %v829
    %v926 = vpack.c.b16 %v910, %v830
    %v927 = vpack.c.b16 %v911, %v831
    %v928 = vpack.c.b16 %v912, %v832
    %v929 = vpack.c.b16 %v913, %v833
    %v930 = vpack.c.b16 %v914, %v834
    %v931 = vpack.c.b16 %v915, %v835
    %v932 = vpack.c.b16 %v916, %v836
    %v933 = vpack.c.b16 %v917, %v837
    %v934 = vpack.c.b16 %v918, %v838
    %v935 = vpack.c.b16 %v919, %v839
    %v937 = vshrl.u32 %v920, 16
    %v939 = vshll.u32 %v920, 16
    %v941 = vrot.slane %v939, 1
    %v942 = vor.u32 %v937, %v941
    %v944 = vshrl.u32 %v921, 16
    %v946 = vshll.u32 %v921, 16
    %v948 = vrot.slane %v946, 1
    %v949 = vor.u32 %v944, %v948
    %v951 = vshrl.u32 %v922, 16
    %v953 = vshll.u32 %v922, 16
    %v955 = vrot.slane %v953, 1
    %v956 = vor.u32 %v951, %v955
    %v958 = vshrl.u32 %v923, 16
    %v960 = vshll.u32 %v923, 16
    %v962 = vrot.slane %v960, 1
    %v963 = vor.u32 %v958, %v962
    %v965 = vshrl.u32 %v924, 16
    %v967 = vshll.u32 %v924, 16
    %v969 = vrot.slane %v967, 1
    %v970 = vor.u32 %v965, %v969
    %v972 = vshrl.u32 %v925, 16
    %v974 = vshll.u32 %v925, 16
    %v976 = vrot.slane %v974, 1
    %v977 = vor.u32 %v972, %v976
    %v979 = vshrl.u32 %v926, 16
    %v981 = vshll.u32 %v926, 16
    %v983 = vrot.slane %v981, 1
    %v984 = vor.u32 %v979, %v983
    %v986 = vshrl.u32 %v927, 16
    %v988 = vshll.u32 %v927, 16
    %v990 = vrot.slane %v988, 1
    %v991 = vor.u32 %v986, %v990
    %v993 = vshrl.u32 %v928, 16
    %v995 = vshll.u32 %v928, 16
    %v997 = vrot.slane %v995, 1
    %v998 = vor.u32 %v993, %v997
    %v1000 = vshrl.u32 %v929, 16
    %v1002 = vshll.u32 %v929, 16
    %v1004 = vrot.slane %v1002, 1
    %v1005 = vor.u32 %v1000, %v1004
    %v1007 = vshrl.u32 %v930, 16
    %v1009 = vshll.u32 %v930, 16
    %v1011 = vrot.slane %v1009, 1
    %v1012 = vor.u32 %v1007, %v1011
    %v1014 = vshrl.u32 %v931, 16
    %v1016 = vshll.u32 %v931, 16
    %v1018 = vrot.slane %v1016, 1
    %v1019 = vor.u32 %v1014, %v1018
    %v1021 = vshrl.u32 %v932, 16
    %v1023 = vshll.u32 %v932, 16
    %v1025 = vrot.slane %v1023, 1
    %v1026 = vor.u32 %v1021, %v1025
    %v1028 = vshrl.u32 %v933, 16
    %v1030 = vshll.u32 %v933, 16
    %v1032 = vrot.slane %v1030, 1
    %v1033 = vor.u32 %v1028, %v1032
    %v1035 = vshrl.u32 %v934, 16
    %v1037 = vshll.u32 %v934, 16
    %v1039 = vrot.slane %v1037, 1
    %v1040 = vor.u32 %v1035, %v1039
    %v1042 = vshrl.u32 %v935, 16
    %v1044 = vshll.u32 %v935, 16
    %v1046 = vrot.slane %v1044, 1
    %v1047 = vor.u32 %v1042, %v1046
    %v1064 = vunpack.c.l.b16 %v423
    %v1065 = vunpack.c.l.b16 %v424
    %v1066 = vunpack.c.l.b16 %v425
    %v1067 = vunpack.c.l.b16 %v426
    %v1068 = vunpack.c.l.b16 %v427
    %v1069 = vunpack.c.l.b16 %v428
    %v1070 = vunpack.c.l.b16 %v429
    %v1071 = vunpack.c.l.b16 %v430
    %v1072 = vunpack.c.l.b16 %v431
    %v1073 = vunpack.c.l.b16 %v432
    %v1074 = vunpack.c.l.b16 %v433
    %v1075 = vunpack.c.l.b16 %v434
    %v1076 = vunpack.c.l.b16 %v435
    %v1077 = vunpack.c.l.b16 %v436
    %v1078 = vunpack.c.l.b16 %v437
    %v1079 = vunpack.c.l.b16 %v438
    %v1080 = vpack.c.b16 %v904, %v1064
    %v1081 = vpack.c.b16 %v905, %v1065
    %v1082 = vpack.c.b16 %v906, %v1066
    %v1083 = vpack.c.b16 %v907, %v1067
    %v1084 = vpack.c.b16 %v908, %v1068
    %v1085 = vpack.c.b16 %v909, %v1069
    %v1086 = vpack.c.b16 %v910, %v1070
    %v1087 = vpack.c.b16 %v911, %v1071
    %v1088 = vpack.c.b16 %v912, %v1072
    %v1089 = vpack.c.b16 %v913, %v1073
    %v1090 = vpack.c.b16 %v914, %v1074
    %v1091 = vpack.c.b16 %v915, %v1075
    %v1092 = vpack.c.b16 %v916, %v1076
    %v1093 = vpack.c.b16 %v917, %v1077
    %v1094 = vpack.c.b16 %v918, %v1078
    %v1095 = vpack.c.b16 %v919, %v1079
    %v1096 = vrot.slane %v1080, 1
    %v1097 = vrot.slane %v1081, 1
    %v1098 = vrot.slane %v1082, 1
    %v1099 = vrot.slane %v1083, 1
    %v1100 = vrot.slane %v1084, 1
    %v1101 = vrot.slane %v1085, 1
    %v1102 = vrot.slane %v1086, 1
    %v1103 = vrot.slane %v1087, 1
    %v1104 = vrot.slane %v1088, 1
    %v1105 = vrot.slane %v1089, 1
    %v1106 = vrot.slane %v1090, 1
    %v1107 = vrot.slane %v1091, 1
    %v1108 = vrot.slane %v1092, 1
    %v1109 = vrot.slane %v1093, 1
    %v1110 = vrot.slane %v1094, 1
    %v1111 = vrot.slane %v1095, 1
    %1112 = vrot.lane.b32.xlu0 %v1096, 32
    %v1113 = vpop.permute.xlu0 %1112
    %1114 = vrot.lane.b32.xlu0 %v1097, 32
    %v1115 = vpop.permute.xlu0 %1114
    %1116 = vrot.lane.b32.xlu0 %v1098, 32
    %v1117 = vpop.permute.xlu0 %1116
    %1118 = vrot.lane.b32.xlu0 %v1099, 32
    %v1119 = vpop.permute.xlu0 %1118
    %1120 = vrot.lane.b32.xlu0 %v1100, 32
    %v1121 = vpop.permute.xlu0 %1120
    %1122 = vrot.lane.b32.xlu0 %v1101, 32
    %v1123 = vpop.permute.xlu0 %1122
    %1124 = vrot.lane.b32.xlu0 %v1102, 32
    %v1125 = vpop.permute.xlu0 %1124
    %1126 = vrot.lane.b32.xlu0 %v1103, 32
    %v1127 = vpop.permute.xlu0 %1126
    %1128 = vrot.lane.b32.xlu0 %v1104, 32
    %v1129 = vpop.permute.xlu0 %1128
    %1130 = vrot.lane.b32.xlu0 %v1105, 32
    %v1131 = vpop.permute.xlu0 %1130
    %1132 = vrot.lane.b32.xlu0 %v1106, 32
    %v1133 = vpop.permute.xlu0 %1132
    %1134 = vrot.lane.b32.xlu0 %v1107, 32
    %v1135 = vpop.permute.xlu0 %1134
    %1136 = vrot.lane.b32.xlu0 %v1108, 32
    %v1137 = vpop.permute.xlu0 %1136
    %1138 = vrot.lane.b32.xlu0 %v1109, 32
    %v1139 = vpop.permute.xlu0 %1138
    %1140 = vrot.lane.b32.xlu0 %v1110, 32
    %v1141 = vpop.permute.xlu0 %1140
    %1142 = vrot.lane.b32.xlu0 %v1111, 32
    %v1143 = vpop.permute.xlu0 %1142
    %v1160 = vunpack.c.l.b16 %v440
    %v1161 = vunpack.c.l.b16 %v441
    %v1162 = vunpack.c.l.b16 %v442
    %v1163 = vunpack.c.l.b16 %v443
    %v1164 = vunpack.c.l.b16 %v444
    %v1165 = vunpack.c.l.b16 %v445
    %v1166 = vunpack.c.l.b16 %v446
    %v1167 = vunpack.c.l.b16 %v447
    %v1168 = vunpack.c.l.b16 %v448
    %v1169 = vunpack.c.l.b16 %v449
    %v1170 = vunpack.c.l.b16 %v450
    %v1171 = vunpack.c.l.b16 %v451
    %v1172 = vunpack.c.l.b16 %v452
    %v1173 = vunpack.c.l.b16 %v453
    %v1174 = vunpack.c.l.b16 %v454
    %v1175 = vunpack.c.l.b16 %v455
    %v1176 = vpack.c.b16 %v1160, %v1160
    %v1177 = vpack.c.b16 %v1161, %v1161
    %v1178 = vpack.c.b16 %v1162, %v1162
    %v1179 = vpack.c.b16 %v1163, %v1163
    %v1180 = vpack.c.b16 %v1164, %v1164
    %v1181 = vpack.c.b16 %v1165, %v1165
    %v1182 = vpack.c.b16 %v1166, %v1166
    %v1183 = vpack.c.b16 %v1167, %v1167
    %v1184 = vpack.c.b16 %v1168, %v1168
    %v1185 = vpack.c.b16 %v1169, %v1169
    %v1186 = vpack.c.b16 %v1170, %v1170
    %v1187 = vpack.c.b16 %v1171, %v1171
    %v1188 = vpack.c.b16 %v1172, %v1172
    %v1189 = vpack.c.b16 %v1173, %v1173
    %v1190 = vpack.c.b16 %v1174, %v1174
    %v1191 = vpack.c.b16 %v1175, %v1175
    %1192 = vrot.lane.b32.xlu0 %v1176, 64
    %v1193 = vpop.permute.xlu0 %1192
    %1194 = vrot.lane.b32.xlu0 %v1177, 64
    %v1195 = vpop.permute.xlu0 %1194
    %1196 = vrot.lane.b32.xlu0 %v1178, 64
    %v1197 = vpop.permute.xlu0 %1196
    %1198 = vrot.lane.b32.xlu0 %v1179, 64
    %v1199 = vpop.permute.xlu0 %1198
    %1200 = vrot.lane.b32.xlu0 %v1180, 64
    %v1201 = vpop.permute.xlu0 %1200
    %1202 = vrot.lane.b32.xlu0 %v1181, 64
    %v1203 = vpop.permute.xlu0 %1202
    %1204 = vrot.lane.b32.xlu0 %v1182, 64
    %v1205 = vpop.permute.xlu0 %1204
    %1206 = vrot.lane.b32.xlu0 %v1183, 64
    %v1207 = vpop.permute.xlu0 %1206
    %1208 = vrot.lane.b32.xlu0 %v1184, 64
    %v1209 = vpop.permute.xlu0 %1208
    %1210 = vrot.lane.b32.xlu0 %v1185, 64
    %v1211 = vpop.permute.xlu0 %1210
    %1212 = vrot.lane.b32.xlu0 %v1186, 64
    %v1213 = vpop.permute.xlu0 %1212
    %1214 = vrot.lane.b32.xlu0 %v1187, 64
    %v1215 = vpop.permute.xlu0 %1214
    %1216 = vrot.lane.b32.xlu0 %v1188, 64
    %v1217 = vpop.permute.xlu0 %1216
    %1218 = vrot.lane.b32.xlu0 %v1189, 64
    %v1219 = vpop.permute.xlu0 %1218
    %1220 = vrot.lane.b32.xlu0 %v1190, 64
    %v1221 = vpop.permute.xlu0 %1220
    %1222 = vrot.lane.b32.xlu0 %v1191, 64
    %v1223 = vpop.permute.xlu0 %1222
    %v1240 = vunpack.c.l.b16 %v456
    %v1241 = vunpack.c.l.b16 %v457
    %v1242 = vunpack.c.l.b16 %v458
    %v1243 = vunpack.c.l.b16 %v459
    %v1244 = vunpack.c.l.b16 %v460
    %v1245 = vunpack.c.l.b16 %v461
    %v1246 = vunpack.c.l.b16 %v462
    %v1247 = vunpack.c.l.b16 %v463
    %v1248 = vunpack.c.l.b16 %v464
    %v1249 = vunpack.c.l.b16 %v465
    %v1250 = vunpack.c.l.b16 %v466
    %v1251 = vunpack.c.l.b16 %v467
    %v1252 = vunpack.c.l.b16 %v468
    %v1253 = vunpack.c.l.b16 %v469
    %v1254 = vunpack.c.l.b16 %v470
    %v1255 = vunpack.c.l.b16 %v471
    %v1256 = vpack.c.b16 %v1240, %v1160
    %v1257 = vpack.c.b16 %v1241, %v1161
    %v1258 = vpack.c.b16 %v1242, %v1162
    %v1259 = vpack.c.b16 %v1243, %v1163
    %v1260 = vpack.c.b16 %v1244, %v1164
    %v1261 = vpack.c.b16 %v1245, %v1165
    %v1262 = vpack.c.b16 %v1246, %v1166
    %v1263 = vpack.c.b16 %v1247, %v1167
    %v1264 = vpack.c.b16 %v1248, %v1168
    %v1265 = vpack.c.b16 %v1249, %v1169
    %v1266 = vpack.c.b16 %v1250, %v1170
    %v1267 = vpack.c.b16 %v1251, %v1171
    %v1268 = vpack.c.b16 %v1252, %v1172
    %v1269 = vpack.c.b16 %v1253, %v1173
    %v1270 = vpack.c.b16 %v1254, %v1174
    %v1271 = vpack.c.b16 %v1255, %v1175
    %v1273 = vshrl.u32 %v1256, 16
    %v1275 = vshll.u32 %v1256, 16
    %v1277 = vrot.slane %v1275, 1
    %v1278 = vor.u32 %v1273, %v1277
    %v1280 = vshrl.u32 %v1257, 16
    %v1282 = vshll.u32 %v1257, 16
    %v1284 = vrot.slane %v1282, 1
    %v1285 = vor.u32 %v1280, %v1284
    %v1287 = vshrl.u32 %v1258, 16
    %v1289 = vshll.u32 %v1258, 16
    %v1291 = vrot.slane %v1289, 1
    %v1292 = vor.u32 %v1287, %v1291
    %v1294 = vshrl.u32 %v1259, 16
    %v1296 = vshll.u32 %v1259, 16
    %v1298 = vrot.slane %v1296, 1
    %v1299 = vor.u32 %v1294, %v1298
    %v1301 = vshrl.u32 %v1260, 16
    %v1303 = vshll.u32 %v1260, 16
    %v1305 = vrot.slane %v1303, 1
    %v1306 = vor.u32 %v1301, %v1305
    %v1308 = vshrl.u32 %v1261, 16
    %v1310 = vshll.u32 %v1261, 16
    %v1312 = vrot.slane %v1310, 1
    %v1313 = vor.u32 %v1308, %v1312
    %v1315 = vshrl.u32 %v1262, 16
    %v1317 = vshll.u32 %v1262, 16
    %v1319 = vrot.slane %v1317, 1
    %v1320 = vor.u32 %v1315, %v1319
    %v1322 = vshrl.u32 %v1263, 16
    %v1324 = vshll.u32 %v1263, 16
    %v1326 = vrot.slane %v1324, 1
    %v1327 = vor.u32 %v1322, %v1326
    %v1329 = vshrl.u32 %v1264, 16
    %v1331 = vshll.u32 %v1264, 16
    %v1333 = vrot.slane %v1331, 1
    %v1334 = vor.u32 %v1329, %v1333
    %v1336 = vshrl.u32 %v1265, 16
    %v1338 = vshll.u32 %v1265, 16
    %v1340 = vrot.slane %v1338, 1
    %v1341 = vor.u32 %v1336, %v1340
    %v1343 = vshrl.u32 %v1266, 16
    %v1345 = vshll.u32 %v1266, 16
    %v1347 = vrot.slane %v1345, 1
    %v1348 = vor.u32 %v1343, %v1347
    %v1350 = vshrl.u32 %v1267, 16
    %v1352 = vshll.u32 %v1267, 16
    %v1354 = vrot.slane %v1352, 1
    %v1355 = vor.u32 %v1350, %v1354
    %v1357 = vshrl.u32 %v1268, 16
    %v1359 = vshll.u32 %v1268, 16
    %v1361 = vrot.slane %v1359, 1
    %v1362 = vor.u32 %v1357, %v1361
    %v1364 = vshrl.u32 %v1269, 16
    %v1366 = vshll.u32 %v1269, 16
    %v1368 = vrot.slane %v1366, 1
    %v1369 = vor.u32 %v1364, %v1368
    %v1371 = vshrl.u32 %v1270, 16
    %v1373 = vshll.u32 %v1270, 16
    %v1375 = vrot.slane %v1373, 1
    %v1376 = vor.u32 %v1371, %v1375
    %v1378 = vshrl.u32 %v1271, 16
    %v1380 = vshll.u32 %v1271, 16
    %v1382 = vrot.slane %v1380, 1
    %v1383 = vor.u32 %v1378, %v1382
    %1384 = vrot.lane.b32.xlu0 %v1278, 96
    %v1385 = vpop.permute.xlu0 %1384
    %1386 = vrot.lane.b32.xlu0 %v1285, 96
    %v1387 = vpop.permute.xlu0 %1386
    %1388 = vrot.lane.b32.xlu0 %v1292, 96
    %v1389 = vpop.permute.xlu0 %1388
    %1390 = vrot.lane.b32.xlu0 %v1299, 96
    %v1391 = vpop.permute.xlu0 %1390
    %1392 = vrot.lane.b32.xlu0 %v1306, 96
    %v1393 = vpop.permute.xlu0 %1392
    %1394 = vrot.lane.b32.xlu0 %v1313, 96
    %v1395 = vpop.permute.xlu0 %1394
    %1396 = vrot.lane.b32.xlu0 %v1320, 96
    %v1397 = vpop.permute.xlu0 %1396
    %1398 = vrot.lane.b32.xlu0 %v1327, 96
    %v1399 = vpop.permute.xlu0 %1398
    %1400 = vrot.lane.b32.xlu0 %v1334, 96
    %v1401 = vpop.permute.xlu0 %1400
    %1402 = vrot.lane.b32.xlu0 %v1341, 96
    %v1403 = vpop.permute.xlu0 %1402
    %1404 = vrot.lane.b32.xlu0 %v1348, 96
    %v1405 = vpop.permute.xlu0 %1404
    %1406 = vrot.lane.b32.xlu0 %v1355, 96
    %v1407 = vpop.permute.xlu0 %1406
    %1408 = vrot.lane.b32.xlu0 %v1362, 96
    %v1409 = vpop.permute.xlu0 %1408
    %1410 = vrot.lane.b32.xlu0 %v1369, 96
    %v1411 = vpop.permute.xlu0 %1410
    %1412 = vrot.lane.b32.xlu0 %v1376, 96
    %v1413 = vpop.permute.xlu0 %1412
    %1414 = vrot.lane.b32.xlu0 %v1383, 96
    %v1415 = vpop.permute.xlu0 %1414
    %v1432 = vunpack.c.l.b16 %v472
    %v1433 = vunpack.c.l.b16 %v473
    %v1434 = vunpack.c.l.b16 %v474
    %v1435 = vunpack.c.l.b16 %v475
    %v1436 = vunpack.c.l.b16 %v476
    %v1437 = vunpack.c.l.b16 %v477
    %v1438 = vunpack.c.l.b16 %v478
    %v1439 = vunpack.c.l.b16 %v479
    %v1440 = vunpack.c.l.b16 %v480
    %v1441 = vunpack.c.l.b16 %v481
    %v1442 = vunpack.c.l.b16 %v482
    %v1443 = vunpack.c.l.b16 %v483
    %v1444 = vunpack.c.l.b16 %v484
    %v1445 = vunpack.c.l.b16 %v485
    %v1446 = vunpack.c.l.b16 %v486
    %v1447 = vunpack.c.l.b16 %v487
    %v1448 = vpack.c.b16 %v1240, %v1432
    %v1449 = vpack.c.b16 %v1241, %v1433
    %v1450 = vpack.c.b16 %v1242, %v1434
    %v1451 = vpack.c.b16 %v1243, %v1435
    %v1452 = vpack.c.b16 %v1244, %v1436
    %v1453 = vpack.c.b16 %v1245, %v1437
    %v1454 = vpack.c.b16 %v1246, %v1438
    %v1455 = vpack.c.b16 %v1247, %v1439
    %v1456 = vpack.c.b16 %v1248, %v1440
    %v1457 = vpack.c.b16 %v1249, %v1441
    %v1458 = vpack.c.b16 %v1250, %v1442
    %v1459 = vpack.c.b16 %v1251, %v1443
    %v1460 = vpack.c.b16 %v1252, %v1444
    %v1461 = vpack.c.b16 %v1253, %v1445
    %v1462 = vpack.c.b16 %v1254, %v1446
    %v1463 = vpack.c.b16 %v1255, %v1447
    %v1464 = vrot.slane %v1448, 1
    %v1465 = vrot.slane %v1449, 1
    %v1466 = vrot.slane %v1450, 1
    %v1467 = vrot.slane %v1451, 1
    %v1468 = vrot.slane %v1452, 1
    %v1469 = vrot.slane %v1453, 1
    %v1470 = vrot.slane %v1454, 1
    %v1471 = vrot.slane %v1455, 1
    %v1472 = vrot.slane %v1456, 1
    %v1473 = vrot.slane %v1457, 1
    %v1474 = vrot.slane %v1458, 1
    %v1475 = vrot.slane %v1459, 1
    %v1476 = vrot.slane %v1460, 1
    %v1477 = vrot.slane %v1461, 1
    %v1478 = vrot.slane %v1462, 1
    %v1479 = vrot.slane %v1463, 1
    %vm1480 = vcmask 261120
    %v1483 = vsel %vm1480, %v343, %v681
    %v1486 = vsel %vm1480, %v344, %v683
    %v1489 = vsel %vm1480, %v345, %v685
    %v1492 = vsel %vm1480, %v346, %v687
    %v1495 = vsel %vm1480, %v347, %v689
    %v1498 = vsel %vm1480, %v348, %v691
    %v1501 = vsel %vm1480, %v349, %v693
    %v1504 = vsel %vm1480, %v350, %v695
    %v1507 = vsel %vm1480, %v351, %v697
    %v1510 = vsel %vm1480, %v352, %v699
    %v1513 = vsel %vm1480, %v353, %v701
    %v1516 = vsel %vm1480, %v354, %v703
    %v1519 = vsel %vm1480, %v355, %v705
    %v1522 = vsel %vm1480, %v356, %v707
    %v1525 = vsel %vm1480, %v357, %v709
    %v1528 = vsel %vm1480, %v358, %v711
    %vm1529 = vcmask 523264
    %v1531 = vsel %vm1529, %v1483, %v777
    %v1533 = vsel %vm1529, %v1486, %v779
    %v1535 = vsel %vm1529, %v1489, %v781
    %v1537 = vsel %vm1529, %v1492, %v783
    %v1539 = vsel %vm1529, %v1495, %v785
    %v1541 = vsel %vm1529, %v1498, %v787
    %v1543 = vsel %vm1529, %v1501, %v789
    %v1545 = vsel %vm1529, %v1504, %v791
    %v1547 = vsel %vm1529, %v1507, %v793
    %v1549 = vsel %vm1529, %v1510, %v795
    %v1551 = vsel %vm1529, %v1513, %v797
    %v1553 = vsel %vm1529, %v1516, %v799
    %v1555 = vsel %vm1529, %v1519, %v801
    %v1557 = vsel %vm1529, %v1522, %v803
    %v1559 = vsel %vm1529, %v1525, %v805
    %v1561 = vsel %vm1529, %v1528, %v807
    %vm1562 = vcmask 785408
    %v1564 = vsel %vm1562, %v1531, %v857
    %v1566 = vsel %vm1562, %v1533, %v859
    %v1568 = vsel %vm1562, %v1535, %v861
    %v1570 = vsel %vm1562, %v1537, %v863
    %v1572 = vsel %vm1562, %v1539, %v865
    %v1574 = vsel %vm1562, %v1541, %v867
    %v1576 = vsel %vm1562, %v1543, %v869
    %v1578 = vsel %vm1562, %v1545, %v871
    %v1580 = vsel %vm1562, %v1547, %v873
    %v1582 = vsel %vm1562, %v1549, %v875
    %v1584 = vsel %vm1562, %v1551, %v877
    %v1586 = vsel %vm1562, %v1553, %v879
    %v1588 = vsel %vm1562, %v1555, %v881
    %v1590 = vsel %vm1562, %v1557, %v883
    %v1592 = vsel %vm1562, %v1559, %v885
    %v1594 = vsel %vm1562, %v1561, %v887
    %v1597 = vsel %vm1480, %v942, %v1113
    %v1600 = vsel %vm1480, %v949, %v1115
    %v1603 = vsel %vm1480, %v956, %v1117
    %v1606 = vsel %vm1480, %v963, %v1119
    %v1609 = vsel %vm1480, %v970, %v1121
    %v1612 = vsel %vm1480, %v977, %v1123
    %v1615 = vsel %vm1480, %v984, %v1125
    %v1618 = vsel %vm1480, %v991, %v1127
    %v1621 = vsel %vm1480, %v998, %v1129
    %v1624 = vsel %vm1480, %v1005, %v1131
    %v1627 = vsel %vm1480, %v1012, %v1133
    %v1630 = vsel %vm1480, %v1019, %v1135
    %v1633 = vsel %vm1480, %v1026, %v1137
    %v1636 = vsel %vm1480, %v1033, %v1139
    %v1639 = vsel %vm1480, %v1040, %v1141
    %v1642 = vsel %vm1480, %v1047, %v1143
    %v1644 = vsel %vm1529, %v1597, %v1193
    %v1646 = vsel %vm1529, %v1600, %v1195
    %v1648 = vsel %vm1529, %v1603, %v1197
    %v1650 = vsel %vm1529, %v1606, %v1199
    %v1652 = vsel %vm1529, %v1609, %v1201
    %v1654 = vsel %vm1529, %v1612, %v1203
    %v1656 = vsel %vm1529, %v1615, %v1205
    %v1658 = vsel %vm1529, %v1618, %v1207
    %v1660 = vsel %vm1529, %v1621, %v1209
    %v1662 = vsel %vm1529, %v1624, %v1211
    %v1664 = vsel %vm1529, %v1627, %v1213
    %v1666 = vsel %vm1529, %v1630, %v1215
    %v1668 = vsel %vm1529, %v1633, %v1217
    %v1670 = vsel %vm1529, %v1636, %v1219
    %v1672 = vsel %vm1529, %v1639, %v1221
    %v1674 = vsel %vm1529, %v1642, %v1223
    %v1676 = vsel %vm1562, %v1644, %v1385
    %v1678 = vsel %vm1562, %v1646, %v1387
    %v1680 = vsel %vm1562, %v1648, %v1389
    %v1682 = vsel %vm1562, %v1650, %v1391
    %v1684 = vsel %vm1562, %v1652, %v1393
    %v1686 = vsel %vm1562, %v1654, %v1395
    %v1688 = vsel %vm1562, %v1656, %v1397
    %v1690 = vsel %vm1562, %v1658, %v1399
    %v1692 = vsel %vm1562, %v1660, %v1401
    %v1694 = vsel %vm1562, %v1662, %v1403
    %v1696 = vsel %vm1562, %v1664, %v1405
    %v1698 = vsel %vm1562, %v1666, %v1407
    %v1700 = vsel %vm1562, %v1668, %v1409
    %v1702 = vsel %vm1562, %v1670, %v1411
    %v1704 = vsel %vm1562, %v1672, %v1413
    %v1706 = vsel %vm1562, %v1674, %v1415
    %v1739 = vunpack.c.l.b16 %v1564
    %v1740 = vunpack.c.l.b16 %v1676
    %v1741 = vunpack.c.l.b16 %v1464
    %v1742 = vunpack.c.l.b16 %v1566
    %v1743 = vunpack.c.l.b16 %v1678
    %v1744 = vunpack.c.l.b16 %v1465
    %v1745 = vunpack.c.l.b16 %v1568
    %v1746 = vunpack.c.l.b16 %v1680
    %v1747 = vunpack.c.l.b16 %v1466
    %v1748 = vunpack.c.l.b16 %v1570
    %v1749 = vunpack.c.l.b16 %v1682
    %v1750 = vunpack.c.l.b16 %v1467
    %v1751 = vunpack.c.l.b16 %v1572
    %v1752 = vunpack.c.l.b16 %v1684
    %v1753 = vunpack.c.l.b16 %v1468
    %v1754 = vunpack.c.l.b16 %v1574
    %v1755 = vunpack.c.l.b16 %v1686
    %v1756 = vunpack.c.l.b16 %v1469
    %v1757 = vunpack.c.l.b16 %v1576
    %v1758 = vunpack.c.l.b16 %v1688
    %v1759 = vunpack.c.l.b16 %v1470
    %v1760 = vunpack.c.l.b16 %v1578
    %v1761 = vunpack.c.l.b16 %v1690
    %v1762 = vunpack.c.l.b16 %v1471
    %v1763 = vunpack.c.l.b16 %v1580
    %v1764 = vunpack.c.l.b16 %v1692
    %v1765 = vunpack.c.l.b16 %v1472
    %v1766 = vunpack.c.l.b16 %v1582
    %v1767 = vunpack.c.l.b16 %v1694
    %v1768 = vunpack.c.l.b16 %v1473
    %v1769 = vunpack.c.l.b16 %v1584
    %v1770 = vunpack.c.l.b16 %v1696
    %v1771 = vunpack.c.l.b16 %v1474
    %v1772 = vunpack.c.l.b16 %v1586
    %v1773 = vunpack.c.l.b16 %v1698
    %v1774 = vunpack.c.l.b16 %v1475
    %v1775 = vunpack.c.l.b16 %v1588
    %v1776 = vunpack.c.l.b16 %v1700
    %v1777 = vunpack.c.l.b16 %v1476
    %v1778 = vunpack.c.l.b16 %v1590
    %v1779 = vunpack.c.l.b16 %v1702
    %v1780 = vunpack.c.l.b16 %v1477
    %v1781 = vunpack.c.l.b16 %v1592
    %v1782 = vunpack.c.l.b16 %v1704
    %v1783 = vunpack.c.l.b16 %v1478
    %v1784 = vunpack.c.l.b16 %v1594
    %v1785 = vunpack.c.l.b16 %v1706
    %v1786 = vunpack.c.l.b16 %v1479
    %v1787 = vld [vmem:[%s1] sm:$0xf]
    %v1788 = vld [vmem:[%s1 + $0x4] sm:$0xf]
    %v1789 = vld [vmem:[%s1 + $0x8] sm:$0xf]
    %v1790 = vld [vmem:[%s1 + $0xc] sm:$0xf]
    %v1791 = vld [vmem:[%s1 + $0x10] sm:$0xf]
    %v1792 = vld [vmem:[%s1 + $0x14] sm:$0xf]
    %v1793 = vld [vmem:[%s1 + $0x18] sm:$0xf]
    %v1794 = vld [vmem:[%s1 + $0x1c] sm:$0xf]
    %v1795 = vld [vmem:[%s1 + $0x20] sm:$0xf]
    %v1796 = vld [vmem:[%s1 + $0x24] sm:$0xf]
    %v1797 = vld [vmem:[%s1 + $0x28] sm:$0xf]
    %v1798 = vld [vmem:[%s1 + $0x2c] sm:$0xf]
    %v1799 = vld [vmem:[%s1 + $0x30] sm:$0xf]
    %v1800 = vld [vmem:[%s1 + $0x34] sm:$0xf]
    %v1801 = vld [vmem:[%s1 + $0x38] sm:$0xf]
    %v1802 = vld [vmem:[%s1 + $0x3c] sm:$0xf]
    %v1803 = vld [vmem:[%s1 + $0x40] sm:$0xf]
    %v1804 = vld [vmem:[%s1 + $0x44] sm:$0xf]
    %v1805 = vld [vmem:[%s1 + $0x48] sm:$0xf]
    %v1806 = vld [vmem:[%s1 + $0x4c] sm:$0xf]
    %v1807 = vld [vmem:[%s1 + $0x50] sm:$0xf]
    %v1808 = vld [vmem:[%s1 + $0x54] sm:$0xf]
    %v1809 = vld [vmem:[%s1 + $0x58] sm:$0xf]
    %v1810 = vld [vmem:[%s1 + $0x5c] sm:$0xf]
    %v1811 = vld [vmem:[%s1 + $0x60] sm:$0xf]
    %v1812 = vld [vmem:[%s1 + $0x64] sm:$0xf]
    %v1813 = vld [vmem:[%s1 + $0x68] sm:$0xf]
    %v1814 = vld [vmem:[%s1 + $0x6c] sm:$0xf]
    %v1815 = vld [vmem:[%s1 + $0x70] sm:$0xf]
    %v1816 = vld [vmem:[%s1 + $0x74] sm:$0xf]
    %v1817 = vld [vmem:[%s1 + $0x78] sm:$0xf]
    %v1818 = vld [vmem:[%s1 + $0x7c] sm:$0xf]
    %v1819 = vld [vmem:[%s1 + $0x80] sm:$0xf]
    %v1820 = vld [vmem:[%s1 + $0x84] sm:$0xf]
    %v1821 = vld [vmem:[%s1 + $0x88] sm:$0xf]
    %v1822 = vld [vmem:[%s1 + $0x8c] sm:$0xf]
    %v1823 = vld [vmem:[%s2] sm:$0x1]
    %v1825 = vlaneseq
    %v1826 = vshrl.u32 %v1825, 7
    %v1827 = vsub.s32 0, %v1826
    %v1828 = vrot.slane %v1823, %v1827
    %v1830 = vpack.c.b16 %v1742, %v1739
    %v1831 = vpack.c.b16 %v1743, %v1740
    %v1832 = vpack.c.b16 %v1744, %v1741
    %v1833 = vpack.c.b16 %v1748, %v1745
    %v1834 = vpack.c.b16 %v1749, %v1746
    %v1835 = vpack.c.b16 %v1750, %v1747
    %v1836 = vpack.c.b16 %v1754, %v1751
    %v1837 = vpack.c.b16 %v1755, %v1752
    %v1838 = vpack.c.b16 %v1756, %v1753
    %v1839 = vpack.c.b16 %v1760, %v1757
    %v1840 = vpack.c.b16 %v1761, %v1758
    %v1841 = vpack.c.b16 %v1762, %v1759
    %v1842 = vpack.c.b16 %v1766, %v1763
    %v1843 = vpack.c.b16 %v1767, %v1764
    %v1844 = vpack.c.b16 %v1768, %v1765
    %v1845 = vpack.c.b16 %v1772, %v1769
    %v1846 = vpack.c.b16 %v1773, %v1770
    %v1847 = vpack.c.b16 %v1774, %v1771
    %v1848 = vpack.c.b16 %v1778, %v1775
    %v1849 = vpack.c.b16 %v1779, %v1776
    %v1850 = vpack.c.b16 %v1780, %v1777
    %v1851 = vpack.c.b16 %v1784, %v1781
    %v1852 = vpack.c.b16 %v1785, %v1782
    %v1853 = vpack.c.b16 %v1786, %v1783
    %v1906 = vunpack.c.l.b16 %v1787
    %v1907 = vunpack.c.l.b16 %v1788
    %v1908 = vunpack.c.l.b16 %v1789
    %v1909 = vunpack.c.l.b16 %v1790
    %v1910 = vunpack.c.l.b16 %v1791
    %v1911 = vunpack.c.l.b16 %v1792
    %v1912 = vunpack.c.l.b16 %v1793
    %v1913 = vunpack.c.l.b16 %v1794
    %v1914 = vunpack.c.l.b16 %v1795
    %v1915 = vunpack.c.l.b16 %v1796
    %v1916 = vunpack.c.l.b16 %v1797
    %v1917 = vunpack.c.l.b16 %v1798
    %v1918 = vunpack.c.l.b16 %v1799
    %v1919 = vunpack.c.l.b16 %v1800
    %v1920 = vunpack.c.l.b16 %v1801
    %v1921 = vunpack.c.l.b16 %v1802
    %v1922 = vunpack.c.l.b16 %v1803
    %v1923 = vunpack.c.l.b16 %v1804
    %v1924 = vunpack.c.l.b16 %v1805
    %v1925 = vunpack.c.l.b16 %v1806
    %v1926 = vunpack.c.l.b16 %v1807
    %v1927 = vunpack.c.l.b16 %v1808
    %v1928 = vunpack.c.l.b16 %v1809
    %v1929 = vunpack.c.l.b16 %v1810
    %v1930 = vunpack.c.l.b16 %v1811
    %v1931 = vunpack.c.l.b16 %v1812
    %v1932 = vunpack.c.l.b16 %v1813
    %v1933 = vunpack.c.l.b16 %v1814
    %v1934 = vunpack.c.l.b16 %v1815
    %v1935 = vunpack.c.l.b16 %v1816
    %v1936 = vunpack.c.l.b16 %v1817
    %v1937 = vunpack.c.l.b16 %v1818
    %v1938 = vunpack.c.l.b16 %v1819
    %v1939 = vunpack.c.l.b16 %v1820
    %v1940 = vunpack.c.l.b16 %v1821
    %v1941 = vunpack.c.l.b16 %v1822
    %v1942 = vpack.c.b16 %v1907, %v1906
    %v1943 = vpack.c.b16 %v1909, %v1908
    %v1944 = vpack.c.b16 %v1911, %v1910
    %v1945 = vpack.c.b16 %v1913, %v1912
    %v1946 = vpack.c.b16 %v1915, %v1914
    %v1947 = vpack.c.b16 %v1917, %v1916
    %v1948 = vpack.c.b16 %v1919, %v1918
    %v1949 = vpack.c.b16 %v1921, %v1920
    %v1950 = vpack.c.b16 %v1923, %v1922
    %v1951 = vpack.c.b16 %v1925, %v1924
    %v1952 = vpack.c.b16 %v1927, %v1926
    %v1953 = vpack.c.b16 %v1929, %v1928
    %v1954 = vpack.c.b16 %v1931, %v1930
    %v1955 = vpack.c.b16 %v1933, %v1932
    %v1956 = vpack.c.b16 %v1935, %v1934
    %v1957 = vpack.c.b16 %v1937, %v1936
    %v1958 = vpack.c.b16 %v1939, %v1938
    %v1959 = vpack.c.b16 %v1941, %v1940
    %v1979 = vsel %vm1480, %v1832, 0
    %v1982 = vsel %vm1480, %v1835, 0
    %v1985 = vsel %vm1480, %v1838, 0
    %v1988 = vsel %vm1480, %v1841, 0
    %v1991 = vsel %vm1480, %v1844, 0
    %v1994 = vsel %vm1480, %v1847, 0
    %v1997 = vsel %vm1480, %v1850, 0
    %v2000 = vsel %vm1480, %v1853, 0
    %2002 = vmatprep.subr.bf16.mxu0 0
    %2003 = vmatpush1.bf16.msra.mxu0 %v1942
    %2004 = vmatprep.subr.bf16.mxu0 0
    %2005 = vmatpush1.bf16.msra.mxu0 %v1943
    %2006 = vmatprep.subr.bf16.mxu0 0
    %2007 = vmatpush1.bf16.msra.mxu0 %v1944
    %2008 = vmatprep.subr.bf16.mxu0 0
    %2009 = vmatpush1.bf16.msra.mxu0 %v1945
    %2010 = vmatprep.subr.bf16.mxu0 0
    %2011 = vmatpush1.bf16.msra.mxu0 %v1946
    %2012 = vmatprep.subr.bf16.mxu0 0
    %2013 = vmatpush1.bf16.msra.mxu0 %v1947
    %2014 = vmatprep.subr.bf16.mxu0 0
    %2015 = vmatpush1.bf16.msra.mxu0 %v1948
    %2016 = vmatprep.subr.bf16.mxu0 0
    %2017 = vmatpush1.bf16.msra.mxu0 %v1949
    %2018 = vmatprep.subr.bf16.mxu0 0
    %2019 = vmatpush1.bf16.msra.mxu0 %v1950
    %2020 = vmatprep.subr.bf16.mxu0 0
    %2021 = vmatpush1.bf16.msra.mxu0 %v1951
    %2022 = vmatprep.subr.bf16.mxu0 0
    %2023 = vmatpush1.bf16.msra.mxu0 %v1952
    %2024 = vmatprep.subr.bf16.mxu0 0
    %2025 = vmatpush1.bf16.msra.mxu0 %v1953
    %2026 = vmatprep.subr.bf16.mxu0 0
    %2027 = vmatpush1.bf16.msra.mxu0 %v1954
    %2028 = vmatprep.subr.bf16.mxu0 0
    %2029 = vmatpush1.bf16.msra.mxu0 %v1955
    %2030 = vmatprep.subr.bf16.mxu0 0
    %2031 = vmatpush1.bf16.msra.mxu0 %v1956
    %2032 = vmatprep.subr.bf16.mxu0 0
    %2033 = vmatpush1.bf16.msra.mxu0 %v1957
    %2034 = vmatprep.mubr.bf16.mxu0 %v1831
    %2035 = vmatmul.mubr.bf16.gmra.mrb[0].mxu0 %v1830
    %v2036 = vpop.f32.mrb[0].mxu0
    %v2037 = vadd.f32 %v1828, %v2036
    %v2038 = vpop.f32.mrb[0].mxu0
    %v2039 = vpop.f32.mrb[0].mxu0
    %v2040 = vadd.f32 %v1828, %v2039
    %v2041 = vpop.f32.mrb[0].mxu0
    %2042 = vmatprep.mubr.bf16.mxu0 %v1834
    %2043 = vmatmul.mubr.bf16.gmra.mrb[0].mxu0 %v1833
    %v2044 = vpop.f32.mrb[0].mxu0
    %v2045 = vadd.f32 %v1828, %v2044
    %v2046 = vpop.f32.mrb[0].mxu0
    %v2047 = vpop.f32.mrb[0].mxu0
    %v2048 = vadd.f32 %v1828, %v2047
    %v2049 = vpop.f32.mrb[0].mxu0
    %2050 = vmatprep.mubr.bf16.mxu0 %v1837
    %2051 = vmatmul.mubr.bf16.gmra.mrb[0].mxu0 %v1836
    %v2052 = vpop.f32.mrb[0].mxu0
    %v2053 = vadd.f32 %v1828, %v2052
    %v2054 = vpop.f32.mrb[0].mxu0
    %v2055 = vpop.f32.mrb[0].mxu0
    %v2056 = vadd.f32 %v1828, %v2055
    %v2057 = vpop.f32.mrb[0].mxu0
    %2058 = vmatprep.mubr.bf16.mxu0 %v1840
    %2059 = vmatmul.mubr.bf16.gmra.mrb[0].mxu0 %v1839
    %v2060 = vpop.f32.mrb[0].mxu0
    %v2061 = vadd.f32 %v1828, %v2060
    %v2062 = vpop.f32.mrb[0].mxu0
    %v2063 = vpop.f32.mrb[0].mxu0
    %v2064 = vadd.f32 %v1828, %v2063
    %v2065 = vpop.f32.mrb[0].mxu0
    %2066 = vmatprep.mubr.bf16.mxu0 %v1843
    %2067 = vmatmul.mubr.bf16.gmra.mrb[0].mxu0 %v1842
    %v2068 = vpop.f32.mrb[0].mxu0
    %v2069 = vadd.f32 %v1828, %v2068
    %v2070 = vpop.f32.mrb[0].mxu0
    %v2071 = vpop.f32.mrb[0].mxu0
    %v2072 = vadd.f32 %v1828, %v2071
    %v2073 = vpop.f32.mrb[0].mxu0
    %2074 = vmatprep.mubr.bf16.mxu0 %v1846
    %2075 = vmatmul.mubr.bf16.gmra.mrb[0].mxu0 %v1845
    %v2076 = vpop.f32.mrb[0].mxu0
    %v2077 = vadd.f32 %v1828, %v2076
    %v2078 = vpop.f32.mrb[0].mxu0
    %v2079 = vpop.f32.mrb[0].mxu0
    %v2080 = vadd.f32 %v1828, %v2079
    %v2081 = vpop.f32.mrb[0].mxu0
    %2082 = vmatprep.mubr.bf16.mxu0 %v1849
    %2083 = vmatmul.mubr.bf16.gmra.mrb[0].mxu0 %v1848
    %v2084 = vpop.f32.mrb[0].mxu0
    %v2085 = vadd.f32 %v1828, %v2084
    %v2086 = vpop.f32.mrb[0].mxu0
    %v2087 = vpop.f32.mrb[0].mxu0
    %v2088 = vadd.f32 %v1828, %v2087
    %v2089 = vpop.f32.mrb[0].mxu0
    %2090 = vmatprep.mubr.bf16.mxu0 %v1852
    %2091 = vmatmul.mubr.bf16.gmra.mrb[0].mxu0 %v1851
    %v2092 = vpop.f32.mrb[0].mxu0
    %v2093 = vadd.f32 %v1828, %v2092
    %v2094 = vpop.f32.mrb[0].mxu0
    %v2095 = vpop.f32.mrb[0].mxu0
    %v2096 = vadd.f32 %v1828, %v2095
    %v2097 = vpop.f32.mrb[0].mxu0
    %2098 = vdwg.mxu0
    %2099 = vmatprep.subr.bf16.mxu0 0
    %2100 = vmatpush1.bf16.msra.mxu0 %v1958
    %2101 = vmatprep.subr.bf16.mxu0 0
    %2102 = vmatpush1.bf16.msra.mxu0 %v1959
    %2103 = vmatprep.subr.bf16.mxu0 0
    %2104 = vmatpush1.bf16.msra.mxu0 0
    %2105 = vmatprep.subr.bf16.mxu0 0
    %2106 = vmatpush1.bf16.msra.mxu0 0
    %2107 = vmatprep.subr.bf16.mxu0 0
    %2108 = vmatpush1.bf16.msra.mxu0 0
    %2109 = vmatprep.subr.bf16.mxu0 0
    %2110 = vmatpush1.bf16.msra.mxu0 0
    %2111 = vmatprep.subr.bf16.mxu0 0
    %2112 = vmatpush1.bf16.msra.mxu0 0
    %2113 = vmatprep.subr.bf16.mxu0 0
    %2114 = vmatpush1.bf16.msra.mxu0 0
    %2115 = vmatprep.subr.bf16.mxu0 0
    %2116 = vmatpush1.bf16.msra.mxu0 0
    %2117 = vmatprep.subr.bf16.mxu0 0
    %2118 = vmatpush1.bf16.msra.mxu0 0
    %2119 = vmatprep.subr.bf16.mxu0 0
    %2120 = vmatpush1.bf16.msra.mxu0 0
    %2121 = vmatprep.subr.bf16.mxu0 0
    %2122 = vmatpush1.bf16.msra.mxu0 0
    %2123 = vmatprep.subr.bf16.mxu0 0
    %2124 = vmatpush1.bf16.msra.mxu0 0
    %2125 = vmatprep.subr.bf16.mxu0 0
    %2126 = vmatpush1.bf16.msra.mxu0 0
    %2127 = vmatprep.subr.bf16.mxu0 0
    %2128 = vmatpush1.bf16.msra.mxu0 0
    %2129 = vmatprep.subr.bf16.mxu0 0
    %2130 = vmatpush1.bf16.msra.mxu0 0
    %2131 = vmatprep.mubr.bf16.mxu0 0
    %2132 = vmatmul.mubr.bf16.gmra.mrb[0].mxu0 %v1979
    %v2133 = vpop.f32.mrb[0].mxu0
    %v2134 = vadd.f32 %v2037, %v2133
    %v2135 = vpop.f32.mrb[0].mxu0
    %v2136 = vpop.f32.mrb[0].mxu0
    %v2137 = vadd.f32 %v2040, %v2136
    %v2138 = vpop.f32.mrb[0].mxu0
    %2139 = vmatprep.mubr.bf16.mxu0 0
    %2140 = vmatmul.mubr.bf16.gmra.mrb[0].mxu0 %v1982
    %v2141 = vpop.f32.mrb[0].mxu0
    %v2142 = vadd.f32 %v2045, %v2141
    %v2143 = vpop.f32.mrb[0].mxu0
    %v2144 = vpop.f32.mrb[0].mxu0
    %v2145 = vadd.f32 %v2048, %v2144
    %v2146 = vpop.f32.mrb[0].mxu0
    %2147 = vmatprep.mubr.bf16.mxu0 0
    %2148 = vmatmul.mubr.bf16.gmra.mrb[0].mxu0 %v1985
    %v2149 = vpop.f32.mrb[0].mxu0
    %v2150 = vadd.f32 %v2053, %v2149
    %v2151 = vpop.f32.mrb[0].mxu0
    %v2152 = vpop.f32.mrb[0].mxu0
    %v2153 = vadd.f32 %v2056, %v2152
    %v2154 = vpop.f32.mrb[0].mxu0
    %2155 = vmatprep.mubr.bf16.mxu0 0
    %2156 = vmatmul.mubr.bf16.gmra.mrb[0].mxu0 %v1988
    %v2157 = vpop.f32.mrb[0].mxu0
    %v2158 = vadd.f32 %v2061, %v2157
    %v2159 = vpop.f32.mrb[0].mxu0
    %v2160 = vpop.f32.mrb[0].mxu0
    %v2161 = vadd.f32 %v2064, %v2160
    %v2162 = vpop.f32.mrb[0].mxu0
    %2163 = vmatprep.mubr.bf16.mxu0 0
    %2164 = vmatmul.mubr.bf16.gmra.mrb[0].mxu0 %v1991
    %v2165 = vpop.f32.mrb[0].mxu0
    %v2166 = vadd.f32 %v2069, %v2165
    %v2167 = vpop.f32.mrb[0].mxu0
    %v2168 = vpop.f32.mrb[0].mxu0
    %v2169 = vadd.f32 %v2072, %v2168
    %v2170 = vpop.f32.mrb[0].mxu0
    %2171 = vmatprep.mubr.bf16.mxu0 0
    %2172 = vmatmul.mubr.bf16.gmra.mrb[0].mxu0 %v1994
    %v2173 = vpop.f32.mrb[0].mxu0
    %v2174 = vadd.f32 %v2077, %v2173
    %v2175 = vpop.f32.mrb[0].mxu0
    %v2176 = vpop.f32.mrb[0].mxu0
    %v2177 = vadd.f32 %v2080, %v2176
    %v2178 = vpop.f32.mrb[0].mxu0
    %2179 = vmatprep.mubr.bf16.mxu0 0
    %2180 = vmatmul.mubr.bf16.gmra.mrb[0].mxu0 %v1997
    %v2181 = vpop.f32.mrb[0].mxu0
    %v2182 = vadd.f32 %v2085, %v2181
    %v2183 = vpop.f32.mrb[0].mxu0
    %v2184 = vpop.f32.mrb[0].mxu0
    %v2185 = vadd.f32 %v2088, %v2184
    %v2186 = vpop.f32.mrb[0].mxu0
    %2187 = vmatprep.mubr.bf16.mxu0 0
    %2188 = vmatmul.mubr.bf16.gmra.mrb[0].mxu0 %v2000
    %v2189 = vpop.f32.mrb[0].mxu0
    %v2190 = vadd.f32 %v2093, %v2189
    %v2191 = vpop.f32.mrb[0].mxu0
    %v2192 = vpop.f32.mrb[0].mxu0
    %v2193 = vadd.f32 %v2096, %v2192
    %v2194 = vpop.f32.mrb[0].mxu0
    %2195 = vdwg.mxu0
    %v2196 = vmax.f32 %v2134, 0.0
    %v2197 = vmax.f32 %v2137, 0.0
    %v2198 = vmax.f32 %v2142, 0.0
    %v2199 = vmax.f32 %v2145, 0.0
    %v2200 = vmax.f32 %v2150, 0.0
    %v2201 = vmax.f32 %v2153, 0.0
    %v2202 = vmax.f32 %v2158, 0.0
    %v2203 = vmax.f32 %v2161, 0.0
    %v2204 = vmax.f32 %v2166, 0.0
    %v2205 = vmax.f32 %v2169, 0.0
    %v2206 = vmax.f32 %v2174, 0.0
    %v2207 = vmax.f32 %v2177, 0.0
    %v2208 = vmax.f32 %v2182, 0.0
    %v2209 = vmax.f32 %v2185, 0.0
    %v2210 = vmax.f32 %v2190, 0.0
    %v2211 = vmax.f32 %v2193, 0.0
    %v2212 = vpack.c.bf16 %v2197, %v2196
    %v2213 = vpack.c.bf16 %v2199, %v2198
    %v2214 = vpack.c.bf16 %v2201, %v2200
    %v2215 = vpack.c.bf16 %v2203, %v2202
    %v2216 = vpack.c.bf16 %v2205, %v2204
    %v2217 = vpack.c.bf16 %v2207, %v2206
    %v2218 = vpack.c.bf16 %v2209, %v2208
    %v2219 = vpack.c.bf16 %v2211, %v2210
    %v2220 = vld [vmem:[%s3] sm:$0xf]
    %v2221 = vld [vmem:[%s3 + $0x4] sm:$0xf]
    %v2222 = vld [vmem:[%s3 + $0x8] sm:$0xf]
    %v2223 = vld [vmem:[%s3 + $0xc] sm:$0xf]
    %v2224 = vld [vmem:[%s3 + $0x10] sm:$0xf]
    %v2225 = vld [vmem:[%s3 + $0x14] sm:$0xf]
    %v2226 = vld [vmem:[%s3 + $0x18] sm:$0xf]
    %v2227 = vld [vmem:[%s3 + $0x1c] sm:$0xf]
    %v2228 = vld [vmem:[%s4] sm:$0x1]
    %v2230 = vlaneseq
    %v2231 = vshrl.u32 %v2230, 7
    %v2232 = vsub.s32 0, %v2231
    %v2233 = vrot.slane %v2228, %v2232
    %v2243 = vunpack.c.l.b16 %v2220
    %v2244 = vunpack.c.l.b16 %v2221
    %v2245 = vunpack.c.l.b16 %v2222
    %v2246 = vunpack.c.l.b16 %v2223
    %v2247 = vunpack.c.l.b16 %v2224
    %v2248 = vunpack.c.l.b16 %v2225
    %v2249 = vunpack.c.l.b16 %v2226
    %v2250 = vunpack.c.l.b16 %v2227
    %v2251 = vpack.c.b16 %v2244, %v2243
    %v2252 = vpack.c.b16 %v2246, %v2245
    %v2253 = vpack.c.b16 %v2248, %v2247
    %v2254 = vpack.c.b16 %v2250, %v2249
    %v2260 = vsel %vm1529, %v2212, 0
    %v2263 = vsel %vm1529, %v2213, 0
    %v2266 = vsel %vm1529, %v2214, 0
    %v2269 = vsel %vm1529, %v2215, 0
    %v2272 = vsel %vm1529, %v2216, 0
    %v2275 = vsel %vm1529, %v2217, 0
    %v2278 = vsel %vm1529, %v2218, 0
    %v2281 = vsel %vm1529, %v2219, 0
    %2283 = vmatprep.subr.bf16.mxu0 0
    %2284 = vmatpush1.bf16.msra.mxu0 %v2251
    %2285 = vmatprep.subr.bf16.mxu0 0
    %2286 = vmatpush1.bf16.msra.mxu0 %v2252
    %2287 = vmatprep.subr.bf16.mxu0 0
    %2288 = vmatpush1.bf16.msra.mxu0 %v2253
    %2289 = vmatprep.subr.bf16.mxu0 0
    %2290 = vmatpush1.bf16.msra.mxu0 %v2254
    %2291 = vmatprep.subr.bf16.mxu0 0
    %2292 = vmatpush1.bf16.msra.mxu0 0
    %2293 = vmatprep.subr.bf16.mxu0 0
    %2294 = vmatpush1.bf16.msra.mxu0 0
    %2295 = vmatprep.subr.bf16.mxu0 0
    %2296 = vmatpush1.bf16.msra.mxu0 0
    %2297 = vmatprep.subr.bf16.mxu0 0
    %2298 = vmatpush1.bf16.msra.mxu0 0
    %2299 = vmatprep.subr.bf16.mxu0 0
    %2300 = vmatpush1.bf16.msra.mxu0 0
    %2301 = vmatprep.subr.bf16.mxu0 0
    %2302 = vmatpush1.bf16.msra.mxu0 0
    %2303 = vmatprep.subr.bf16.mxu0 0
    %2304 = vmatpush1.bf16.msra.mxu0 0
    %2305 = vmatprep.subr.bf16.mxu0 0
    %2306 = vmatpush1.bf16.msra.mxu0 0
    %2307 = vmatprep.subr.bf16.mxu0 0
    %2308 = vmatpush1.bf16.msra.mxu0 0
    %2309 = vmatprep.subr.bf16.mxu0 0
    %2310 = vmatpush1.bf16.msra.mxu0 0
    %2311 = vmatprep.subr.bf16.mxu0 0
    %2312 = vmatpush1.bf16.msra.mxu0 0
    %2313 = vmatprep.subr.bf16.mxu0 0
    %2314 = vmatpush1.bf16.msra.mxu0 0
    %2315 = vmatprep.mubr.bf16.mxu0 0
    %2316 = vmatmul.mubr.bf16.gmra.mrb[0].mxu0 %v2260
    %v2317 = vpop.f32.mrb[0].mxu0
    %v2318 = vadd.f32 %v2233, %v2317
    %v2319 = vpop.f32.mrb[0].mxu0
    %v2320 = vpop.f32.mrb[0].mxu0
    %v2321 = vadd.f32 %v2233, %v2320
    %v2322 = vpop.f32.mrb[0].mxu0
    %2323 = vmatprep.mubr.bf16.mxu0 0
    %2324 = vmatmul.mubr.bf16.gmra.mrb[0].mxu0 %v2263
    %v2325 = vpop.f32.mrb[0].mxu0
    %v2326 = vadd.f32 %v2233, %v2325
    %v2327 = vpop.f32.mrb[0].mxu0
    %v2328 = vpop.f32.mrb[0].mxu0
    %v2329 = vadd.f32 %v2233, %v2328
    %v2330 = vpop.f32.mrb[0].mxu0
    %2331 = vmatprep.mubr.bf16.mxu0 0
    %2332 = vmatmul.mubr.bf16.gmra.mrb[0].mxu0 %v2266
    %v2333 = vpop.f32.mrb[0].mxu0
    %v2334 = vadd.f32 %v2233, %v2333
    %v2335 = vpop.f32.mrb[0].mxu0
    %v2336 = vpop.f32.mrb[0].mxu0
    %v2337 = vadd.f32 %v2233, %v2336
    %v2338 = vpop.f32.mrb[0].mxu0
    %2339 = vmatprep.mubr.bf16.mxu0 0
    %2340 = vmatmul.mubr.bf16.gmra.mrb[0].mxu0 %v2269
    %v2341 = vpop.f32.mrb[0].mxu0
    %v2342 = vadd.f32 %v2233, %v2341
    %v2343 = vpop.f32.mrb[0].mxu0
    %v2344 = vpop.f32.mrb[0].mxu0
    %v2345 = vadd.f32 %v2233, %v2344
    %v2346 = vpop.f32.mrb[0].mxu0
    %2347 = vmatprep.mubr.bf16.mxu0 0
    %2348 = vmatmul.mubr.bf16.gmra.mrb[0].mxu0 %v2272
    %v2349 = vpop.f32.mrb[0].mxu0
    %v2350 = vadd.f32 %v2233, %v2349
    %v2351 = vpop.f32.mrb[0].mxu0
    %v2352 = vpop.f32.mrb[0].mxu0
    %v2353 = vadd.f32 %v2233, %v2352
    %v2354 = vpop.f32.mrb[0].mxu0
    %2355 = vmatprep.mubr.bf16.mxu0 0
    %2356 = vmatmul.mubr.bf16.gmra.mrb[0].mxu0 %v2275
    %v2357 = vpop.f32.mrb[0].mxu0
    %v2358 = vadd.f32 %v2233, %v2357
    %v2359 = vpop.f32.mrb[0].mxu0
    %v2360 = vpop.f32.mrb[0].mxu0
    %v2361 = vadd.f32 %v2233, %v2360
    %v2362 = vpop.f32.mrb[0].mxu0
    %2363 = vmatprep.mubr.bf16.mxu0 0
    %2364 = vmatmul.mubr.bf16.gmra.mrb[0].mxu0 %v2278
    %v2365 = vpop.f32.mrb[0].mxu0
    %v2366 = vadd.f32 %v2233, %v2365
    %v2367 = vpop.f32.mrb[0].mxu0
    %v2368 = vpop.f32.mrb[0].mxu0
    %v2369 = vadd.f32 %v2233, %v2368
    %v2370 = vpop.f32.mrb[0].mxu0
    %2371 = vmatprep.mubr.bf16.mxu0 0
    %2372 = vmatmul.mubr.bf16.gmra.mrb[0].mxu0 %v2281
    %v2373 = vpop.f32.mrb[0].mxu0
    %v2374 = vadd.f32 %v2233, %v2373
    %v2375 = vpop.f32.mrb[0].mxu0
    %v2376 = vpop.f32.mrb[0].mxu0
    %v2377 = vadd.f32 %v2233, %v2376
    %v2378 = vpop.f32.mrb[0].mxu0
    %2379 = vdwg.mxu0
    %2380 = vst [vmem:[#allocation3] sm:$0xff] %v2318
    %2381 = vst [vmem:[#allocation3 + $0x8] sm:$0xff] %v2321
    %2382 = vst [vmem:[#allocation3 + $0x10] sm:$0xff] %v2326
    %2383 = vst [vmem:[#allocation3 + $0x18] sm:$0xff] %v2329
    %2384 = vst [vmem:[#allocation3 + $0x20] sm:$0xff] %v2334
    %2385 = vst [vmem:[#allocation3 + $0x28] sm:$0xff] %v2337
    %2386 = vst [vmem:[#allocation3 + $0x30] sm:$0xff] %v2342
    %2387 = vst [vmem:[#allocation3 + $0x38] sm:$0xff] %v2345
    %2388 = vst [vmem:[#allocation3 + $0x40] sm:$0xff] %v2350
    %2389 = vst [vmem:[#allocation3 + $0x48] sm:$0xff] %v2353
    %2390 = vst [vmem:[#allocation3 + $0x50] sm:$0xff] %v2358
    %2391 = vst [vmem:[#allocation3 + $0x58] sm:$0xff] %v2361
    %2392 = vst [vmem:[#allocation3 + $0x60] sm:$0xff] %v2366
    %2393 = vst [vmem:[#allocation3 + $0x68] sm:$0xff] %v2369
    %2394 = vst [vmem:[#allocation3 + $0x70] sm:$0xff] %v2374
    %2395 = vst [vmem:[#allocation3 + $0x78] sm:$0xff] %v2377
    // Predicated region
    $region22: #{tpu_custom_call.1} parent=1 // pred_check
      _
    $region23: #{tpu_custom_call.1} parent=1 // pred_check_branch
      %2397 = sbr.rel (0) target = $region25
    $region24: #{tpu_custom_call.1} parent=1 // pred_region
      %s2399 = ssub.s32 2048, 2048
      %2400 = vsyncadd [#allocation4], %s2399
      %s2401 = sshll.u32 [#allocation3], 4
      %s2402 = int_to_ptr.vmem [resolvable:$true] %s2401
      %2407 = dma.vmem_to_hbm [thread:$0]  %s2402, 2048, %s5, [#allocation4], 128, 128, 8
    $region25: #{tpu_custom_call.1} parent=1 // pred_fallthru
      _
    // Predicated region
    $region26: #{tpu_custom_call.1} parent=1 // pred_check
      _
    $region27: #{tpu_custom_call.1} parent=1 // pred_check_branch
      %2409 = sbr.rel (0) target = $region29
    $region28: #{tpu_custom_call.1} parent=1 // pred_region
      %2410 = dma.done [#allocation4], 2048
    $region29: #{tpu_custom_call.1} parent=1 // pred_fallthru
      _
    %2411 = vsyncpa [#allocation4], 1

</llo_original>
